<compile_context>
chip_gen: v7x
topology: tpu7x:2x2x1
jax: 0.10.0
libtpu: 0.0.40
codegen_flags: <defaults>
</compile_context>

<pallas_src>
import jax
import jax.numpy as jnp
from jax.experimental import pallas as pl
from jax.experimental.pallas import tpu as pltpu

IN_DIM = 3 * 28 * 28   # 2352
H1 = 100
H2 = 100
H3 = 16
HP = 128               # lane-padded hidden/output width
N_OUTPUT = 10          # fc output dim (dead code in forward; unused)

DEFAULT_TB = 1024              # max batch rows per grid step
VMEM_LIMIT = 40 * 1024 * 1024  # scoped VMEM cap; within physical on v5e/v6e/v7x


def _round_up(n, m):
    return ((n + m - 1) // m) * m


def _choose_tb(B, tb):
    """Batch tile: multiple of 16 (or the full batch for tiny B), capped at
    ~ceil(B/2) so the grid has >=2 steps and v7x's 2nd TensorCore is used."""
    if B <= 16:
        return B                          # block == full dim is always legal; grid=(1,)
    half = _round_up((B + 1) // 2, 16)
    return max(16, min(tb, half))


def _mlp_kernel(x_ref, w1_ref, b1_ref, w2_ref, b2_ref, w3_ref, b3_ref, out_ref):
    # One batch tile per grid step: three lane-dense MXU matmuls + VPU ReLUs.
    # x is cast to bf16 here (free VPU work in this HBM-bound kernel);
    # accumulation and bias-add are f32 via preferred_element_type.
    x = x_ref[...].astype(jnp.bfloat16)
    h = jnp.dot(x, w1_ref[...], preferred_element_type=jnp.float32) + b1_ref[...]
    h = jnp.maximum(h, 0.0)
    h = jnp.dot(h.astype(jnp.bfloat16), w2_ref[...],
                preferred_element_type=jnp.float32) + b2_ref[...]
    h = jnp.maximum(h, 0.0)
    h = jnp.dot(h.astype(jnp.bfloat16), w3_ref[...],
                preferred_element_type=jnp.float32) + b3_ref[...]
    h = jnp.maximum(h, 0.0)
    out_ref[...] = h.astype(out_ref.dtype)
    # TODO(synk): PyTorch forward also evaluates self.fc(out) into `final_out`,
    # but never uses or returns it (dead code) -- omitted here.


def prepare_params(params):
    """One-time prep: pad widths to 128 lanes and cast weights to bf16."""
    w1, b1, w2, b2, w3, b3 = params

    def pad_b(b):
        return jnp.pad(b, ((0, 0), (0, HP - b.shape[1]))).astype(jnp.float32)

    w1p = jnp.pad(w1, ((0, 0), (0, HP - w1.shape[1]))).astype(jnp.bfloat16)
    # Pad W2/W3 input rows too (100 -> 128) so shapes chain 128-wide.
    w2p = jnp.pad(w2, ((0, HP - w2.shape[0]), (0, HP - w2.shape[1]))).astype(jnp.bfloat16)
    w3p = jnp.pad(w3, ((0, HP - w3.shape[0]), (0, HP - w3.shape[1]))).astype(jnp.bfloat16)
    return (w1p, pad_b(b1), w2p, pad_b(b2), w3p, pad_b(b3))


def mlp_forward(x, prepared, tb=DEFAULT_TB, slice_output=True):
    """x: (B, IN_DIM) f32 or bf16, streamed in its native dtype (no wrapper cast).

    Returns (B, 16) bf16 (the mlp output, pre-fc).  With slice_output=False,
    returns the lane-dense padded (B, 128) bf16 slab (columns 16: are zeros),
    skipping the extra HBM slice pass.
    """
    w1, b1, w2, b2, w3, b3 = prepared
    B, in_dim = x.shape
    assert in_dim == IN_DIM, (in_dim, IN_DIM)

    TB = _choose_tb(B, tb)
    grid = (pl.cdiv(B, TB),)   # ragged last block: OOB tail rows dropped on write

    out = pl.pallas_call(
        _mlp_kernel,
        out_shape=jax.ShapeDtypeStruct((B, HP), jnp.bfloat16),
        grid=grid,
        in_specs=[
            pl.BlockSpec((TB, IN_DIM), lambda i: (i, 0)),   # streamed x tile
            pl.BlockSpec((IN_DIM, HP), lambda i: (0, 0)),   # resident weights
            pl.BlockSpec((1, HP), lambda i: (0, 0)),
            pl.BlockSpec((HP, HP), lambda i: (0, 0)),
            pl.BlockSpec((1, HP), lambda i: (0, 0)),
            pl.BlockSpec((HP, HP), lambda i: (0, 0)),
            pl.BlockSpec((1, HP), lambda i: (0, 0)),
        ],
        out_specs=pl.BlockSpec((TB, HP), lambda i: (i, 0)),
        compiler_params=pltpu.CompilerParams(
            dimension_semantics=("parallel",),
            vmem_limit_bytes=VMEM_LIMIT),
    )(x, w1, b1, w2, b2, w3, b3)

    if slice_output:
        return out[:, :H3]
    return out


def init_params(key):
    """Deterministic init mimicking nn.Linear's U(-1/sqrt(fan_in), 1/sqrt(fan_in))."""
    def linear(key, fan_in, fan_out):
        kw, kb = jax.random.split(key)
        bound = 1.0 / jnp.sqrt(jnp.float32(fan_in))
        # stored as (in, out) == W^T so kernel does x @ W
        w = jax.random.uniform(kw, (fan_in, fan_out), jnp.float32, -bound, bound)
        b = jax.random.uniform(kb, (1, fan_out), jnp.float32, -bound, bound)
        return w, b

    k1, k2, k3 = jax.random.split(key, 3)
    w1, b1 = linear(k1, IN_DIM, H1)
    w2, b2 = linear(k2, H1, H2)
    w3, b3 = linear(k3, H2, H3)
    return (w1, b1, w2, b2, w3, b3)


def mlp_reference(x, params):
    w1, b1, w2, b2, w3, b3 = params
    h = jnp.maximum(x @ w1 + b1, 0.0)
    h = jnp.maximum(h @ w2 + b2, 0.0)
    h = jnp.maximum(h @ w3 + b3, 0.0)
    return h


if __name__ == "__main__":
    key = jax.random.PRNGKey(0)
    kx, kp = jax.random.split(key)

    params = init_params(kp)
    prepared = prepare_params(params)   # pad + bf16-cast once, not per call

    # Small primary case (matches the module interface): batch=2.
    B = 2
    x = jax.random.normal(kx, (B, IN_DIM), dtype=jnp.float32)
    out = mlp_forward(x, prepared)
    jax.block_until_ready(out)
    assert out.shape == (B, H3), out.shape
    ref = mlp_reference(x, params)      # f32 reference, unpadded weights
    # bf16 matmul inputs / bf16 output (f32 accumulation) -> loosened tolerance.
    assert jnp.allclose(out.astype(jnp.float32), ref, atol=2e-2, rtol=2e-2), \
        "mismatch vs. reference (B=2)"

    # Also exercise the multi-step grid + ragged last block path
    # (B=50 -> TB=32, grid=(2,), 14 undefined tail rows dropped on write).
    B2 = 50
    x2 = jax.random.normal(kx, (B2, IN_DIM), dtype=jnp.float32)
    out2 = mlp_forward(x2, prepared)
    jax.block_until_ready(out2)
    assert out2.shape == (B2, H3), out2.shape
    ref2 = mlp_reference(x2, params)
    assert jnp.allclose(out2.astype(jnp.float32), ref2, atol=2e-2, rtol=2e-2), \
        "mismatch vs. reference (B=50, ragged)"

    print("KERNEL_OK")
</pallas_src>

<mosaic_0001>
module attributes {stable_mosaic.version = 11 : i64} {
  func.func @_mlp_kernel(%arg0: i32, %arg1: memref<2x2352xf32, #tpu.memory_space<vmem>>, %arg2: memref<2352x128xbf16, #tpu.memory_space<vmem>>, %arg3: memref<1x128xf32, #tpu.memory_space<vmem>>, %arg4: memref<128x128xbf16, #tpu.memory_space<vmem>>, %arg5: memref<1x128xf32, #tpu.memory_space<vmem>>, %arg6: memref<128x128xbf16, #tpu.memory_space<vmem>>, %arg7: memref<1x128xf32, #tpu.memory_space<vmem>>, %arg8: memref<2x128xbf16, #tpu.memory_space<vmem>>) attributes {dimension_semantics = [#tpu.dimension_semantics<parallel>], iteration_bounds = array<i64: 1>, scalar_prefetch = 0 : i64, scratch_operands = 0 : i64, tpu.core_type = #tpu.core_type<tc>, window_params = [{transform_indices = @transform_0, window_bounds = array<i64: 2, 2352>}, {pipeline_mode = #tpu.pipeline_mode<synchronous>, transform_indices = @transform_1, window_bounds = array<i64: 2352, 128>}, {pipeline_mode = #tpu.pipeline_mode<synchronous>, transform_indices = @transform_2, window_bounds = array<i64: 1, 128>}, {pipeline_mode = #tpu.pipeline_mode<synchronous>, transform_indices = @transform_3, window_bounds = array<i64: 128, 128>}, {pipeline_mode = #tpu.pipeline_mode<synchronous>, transform_indices = @transform_4, window_bounds = array<i64: 1, 128>}, {pipeline_mode = #tpu.pipeline_mode<synchronous>, transform_indices = @transform_5, window_bounds = array<i64: 128, 128>}, {pipeline_mode = #tpu.pipeline_mode<synchronous>, transform_indices = @transform_6, window_bounds = array<i64: 1, 128>}, {transform_indices = @transform_7, window_bounds = array<i64: 2, 128>}]} {
    %c0 = arith.constant 0 : index
    %c0_0 = arith.constant 0 : index
    %0 = vector.load %arg1[%c0, %c0_0] : memref<2x2352xf32, #tpu.memory_space<vmem>>, vector<2x2352xf32>
    %1 = arith.truncf %0 : vector<2x2352xf32> to vector<2x2352xbf16>
    %c0_1 = arith.constant 0 : index
    %c0_2 = arith.constant 0 : index
    %2 = vector.load %arg2[%c0_1, %c0_2] : memref<2352x128xbf16, #tpu.memory_space<vmem>>, vector<2352x128xbf16>
    %cst = arith.constant dense<0.000000e+00> : vector<2x128xf32>
    %3 = tpu.matmul %1, %2, %cst {dimension_numbers = #tpu.dot_dimension_numbers<[1], [0], [0], [1], [0, 0, 1, 1], [], []>} : vector<2x2352xbf16>, vector<2352x128xbf16>, vector<2x128xf32> -> vector<2x128xf32>
    %c0_3 = arith.constant 0 : index
    %c0_4 = arith.constant 0 : index
    %4 = vector.load %arg3[%c0_3, %c0_4] : memref<1x128xf32, #tpu.memory_space<vmem>>, vector<1x128xf32>
    %5 = vector.broadcast %4 : vector<1x128xf32> to vector<2x128xf32>
    %6 = arith.addf %3, %5 : vector<2x128xf32>
    %cst_5 = arith.constant 0.000000e+00 : f32
    %7 = vector.broadcast %cst_5 : f32 to vector<2x128xf32>
    %8 = arith.maximumf %6, %7 : vector<2x128xf32>
    %9 = arith.truncf %8 : vector<2x128xf32> to vector<2x128xbf16>
    %c0_6 = arith.constant 0 : index
    %c0_7 = arith.constant 0 : index
    %10 = vector.load %arg4[%c0_6, %c0_7] : memref<128x128xbf16, #tpu.memory_space<vmem>>, vector<128x128xbf16>
    %cst_8 = arith.constant dense<0.000000e+00> : vector<2x128xf32>
    %11 = tpu.matmul %9, %10, %cst_8 {dimension_numbers = #tpu.dot_dimension_numbers<[1], [0], [0], [1], [0, 0, 1, 1], [], []>} : vector<2x128xbf16>, vector<128x128xbf16>, vector<2x128xf32> -> vector<2x128xf32>
    %c0_9 = arith.constant 0 : index
    %c0_10 = arith.constant 0 : index
    %12 = vector.load %arg5[%c0_9, %c0_10] : memref<1x128xf32, #tpu.memory_space<vmem>>, vector<1x128xf32>
    %13 = vector.broadcast %12 : vector<1x128xf32> to vector<2x128xf32>
    %14 = arith.addf %11, %13 : vector<2x128xf32>
    %cst_11 = arith.constant 0.000000e+00 : f32
    %15 = vector.broadcast %cst_11 : f32 to vector<2x128xf32>
    %16 = arith.maximumf %14, %15 : vector<2x128xf32>
    %17 = arith.truncf %16 : vector<2x128xf32> to vector<2x128xbf16>
    %c0_12 = arith.constant 0 : index
    %c0_13 = arith.constant 0 : index
    %18 = vector.load %arg6[%c0_12, %c0_13] : memref<128x128xbf16, #tpu.memory_space<vmem>>, vector<128x128xbf16>
    %cst_14 = arith.constant dense<0.000000e+00> : vector<2x128xf32>
    %19 = tpu.matmul %17, %18, %cst_14 {dimension_numbers = #tpu.dot_dimension_numbers<[1], [0], [0], [1], [0, 0, 1, 1], [], []>} : vector<2x128xbf16>, vector<128x128xbf16>, vector<2x128xf32> -> vector<2x128xf32>
    %c0_15 = arith.constant 0 : index
    %c0_16 = arith.constant 0 : index
    %20 = vector.load %arg7[%c0_15, %c0_16] : memref<1x128xf32, #tpu.memory_space<vmem>>, vector<1x128xf32>
    %21 = vector.broadcast %20 : vector<1x128xf32> to vector<2x128xf32>
    %22 = arith.addf %19, %21 : vector<2x128xf32>
    %cst_17 = arith.constant 0.000000e+00 : f32
    %23 = vector.broadcast %cst_17 : f32 to vector<2x128xf32>
    %24 = arith.maximumf %22, %23 : vector<2x128xf32>
    %25 = arith.truncf %24 : vector<2x128xf32> to vector<2x128xbf16>
    %c0_18 = arith.constant 0 : index
    %c0_19 = arith.constant 0 : index
    %26 = vector.load %arg8[%c0_18, %c0_19] : memref<2x128xbf16, #tpu.memory_space<vmem>>, vector<2x128xbf16>
    tpu.vector_store %arg8[%c0_18, %c0_19], %25 {strides = array<i32>} : memref<2x128xbf16, #tpu.memory_space<vmem>>, vector<2x128xbf16>,
    return
  }
  func.func @transform_0(%arg0: i32) -> (i32, i32) {
    %c0_i32 = arith.constant 0 : i32
    %c0_i32_0 = arith.constant 0 : i32
    return %arg0, %c0_i32 : i32, i32
  }
  func.func @transform_1(%arg0: i32) -> (i32, i32) {
    %c0_i32 = arith.constant 0 : i32
    %c0_i32_0 = arith.constant 0 : i32
    %c0_i32_1 = arith.constant 0 : i32
    return %c0_i32, %c0_i32_0 : i32, i32
  }
  func.func @transform_2(%arg0: i32) -> (i32, i32) {
    %c0_i32 = arith.constant 0 : i32
    %c0_i32_0 = arith.constant 0 : i32
    %c0_i32_1 = arith.constant 0 : i32
    return %c0_i32, %c0_i32_0 : i32, i32
  }
  func.func @transform_3(%arg0: i32) -> (i32, i32) {
    %c0_i32 = arith.constant 0 : i32
    %c0_i32_0 = arith.constant 0 : i32
    %c0_i32_1 = arith.constant 0 : i32
    return %c0_i32, %c0_i32_0 : i32, i32
  }
  func.func @transform_4(%arg0: i32) -> (i32, i32) {
    %c0_i32 = arith.constant 0 : i32
    %c0_i32_0 = arith.constant 0 : i32
    %c0_i32_1 = arith.constant 0 : i32
    return %c0_i32, %c0_i32_0 : i32, i32
  }
  func.func @transform_5(%arg0: i32) -> (i32, i32) {
    %c0_i32 = arith.constant 0 : i32
    %c0_i32_0 = arith.constant 0 : i32
    %c0_i32_1 = arith.constant 0 : i32
    return %c0_i32, %c0_i32_0 : i32, i32
  }
  func.func @transform_6(%arg0: i32) -> (i32, i32) {
    %c0_i32 = arith.constant 0 : i32
    %c0_i32_0 = arith.constant 0 : i32
    %c0_i32_1 = arith.constant 0 : i32
    return %c0_i32, %c0_i32_0 : i32, i32
  }
  func.func @transform_7(%arg0: i32) -> (i32, i32) {
    %c0_i32 = arith.constant 0 : i32
    %c0_i32_0 = arith.constant 0 : i32
    return %arg0, %c0_i32 : i32, i32
  }
}

</mosaic_0001>

<llo_original>
// kernel: tpu_custom_call.1
$region0: #{tpu_custom_call.1}
  #allocation0 [shape = 'u32[]', space=smem, size = 0x4, offset = 0x4, fixed_abs, tag = 'smem constant byte address 0x4 - core index']
  #allocation1 [shape = 'u32[144,128]{1,0:T(1,128)}', space=vmem, size = 0x12000, scoped, tag = 'internal scratch']
  %s0 = inlined_call_operand.hbm [shape: f32[2,2352], index: 0, kind: input, shape index: {}]
  %s1 = inlined_call_operand.hbm [shape: bf16[2352,128], index: 1, kind: input, shape index: {}]
  %s2 = inlined_call_operand.vmem [shape: f32[1,128], index: 2, kind: input, shape index: {}]
  %s3 = inlined_call_operand.hbm [shape: bf16[128,128], index: 3, kind: input, shape index: {}]
  %s4 = inlined_call_operand.vmem [shape: f32[1,128], index: 4, kind: input, shape index: {}]
  %s5 = inlined_call_operand.hbm [shape: bf16[128,128], index: 5, kind: input, shape index: {}]
  %s6 = inlined_call_operand.vmem [shape: f32[1,128], index: 6, kind: input, shape index: {}]
  %s7 = inlined_call_operand.hbm [shape: bf16[2,128], index: 7, kind: output, shape index: {}]
  %s8 = sld [smem:[#allocation0]]
  $region54: #{tpu_custom_call.1} parent=0
    _
  %s10 = ssub.s32 1, %s8
  %s11 = scalar_select 0, %s10, %s8
  $region1: #{tpu_custom_call.1} parent=0
    #allocation2 [shape = 'u8[19456]{0}', space=vmem, size = 0x4c00, scoped, tag = 'input window, operand 0, single buffered']
    #allocation3 [shape = 's32[1]{0}', space=sflag, size = 0x4, scoped, tag = 'scoped memory for tpu_custom_call.1']
    #allocation4 [shape = 's32[1]{0}', space=sflag, size = 0x4, scoped, tag = 'scoped memory for tpu_custom_call.1']
    #allocation5 [shape = 'u8[602112]{0}', space=vmem, size = 0x93000, scoped, tag = 'input window, operand 1, single buffered']
    #allocation6 [shape = 's32[1]{0}', space=sflag, size = 0x4, scoped, tag = 'scoped memory for tpu_custom_call.1']
    #allocation7 [shape = 'u8[32768]{0}', space=vmem, size = 0x8000, scoped, tag = 'input window, operand 3, single buffered']
    #allocation8 [shape = 'u8[32768]{0}', space=vmem, size = 0x8000, scoped, tag = 'input window, operand 5, single buffered']
    #allocation9 [shape = 's32[1]{0}', space=sflag, size = 0x4, scoped, tag = 'scoped memory for tpu_custom_call.1']
    #allocation10 [shape = 'u8[512]{0}', space=vmem, size = 0x400, scoped, tag = 'output window, operand 0, single buffered']
    %12 = vsyncpa [#allocation3], 0
    %13 = vsyncpa [#allocation6], 0
    %14 = vsyncpa [#allocation9], 0
    %15 = vsyncpa [#allocation4], 0
    // Predicated region
    $region2: #{tpu_custom_call.1} parent=1 // pred_check
      _
    $region3: #{tpu_custom_call.1} parent=1 // pred_check_branch
      %17 = sbr.rel (0) target = $region5
    $region4: #{tpu_custom_call.1} parent=1 // pred_region
      %s19 = ssub.s32 608, 608
      %20 = vsyncadd [#allocation3], %s19
      %s22 = sshll.u32 [#allocation2], 4
      %s23 = int_to_ptr.vmem [resolvable:$true] %s22
      %25 = dma.hbm_to_vmem [thread:$0]  %s0, 608, %s23, [#allocation3]
    $region5: #{tpu_custom_call.1} parent=1 // pred_fallthru
      _
    // Predicated region
    $region6: #{tpu_custom_call.1} parent=1 // pred_check
      _
    $region7: #{tpu_custom_call.1} parent=1 // pred_check_branch
      %27 = sbr.rel (0) target = $region9
    $region8: #{tpu_custom_call.1} parent=1 // pred_region
      %s29 = ssub.s32 18816, 18816
      %30 = vsyncadd [#allocation6], %s29
      %s31 = sshll.u32 [#allocation5], 4
      %s32 = int_to_ptr.vmem [resolvable:$true] %s31
      %37 = dma.hbm_to_vmem [thread:$0]  %s1, 18816, %s32, [#allocation6], 64, 64, 4
    $region9: #{tpu_custom_call.1} parent=1 // pred_fallthru
      _
    // Predicated region
    $region10: #{tpu_custom_call.1} parent=1 // pred_check
      _
    $region11: #{tpu_custom_call.1} parent=1 // pred_check_branch
      %39 = sbr.rel (0) target = $region13
    $region12: #{tpu_custom_call.1} parent=1 // pred_region
      _
    $region13: #{tpu_custom_call.1} parent=1 // pred_fallthru
      _
    // Predicated region
    $region14: #{tpu_custom_call.1} parent=1 // pred_check
      _
    $region15: #{tpu_custom_call.1} parent=1 // pred_check_branch
      %41 = sbr.rel (0) target = $region17
    $region16: #{tpu_custom_call.1} parent=1 // pred_region
      %s43 = ssub.s32 1024, 1024
      %44 = vsyncadd [#allocation6], %s43
      %s45 = sshll.u32 [#allocation7], 4
      %s46 = int_to_ptr.vmem [resolvable:$true] %s45
      %51 = dma.hbm_to_vmem [thread:$0]  %s3, 1024, %s46, [#allocation6], 64, 64, 4
    $region17: #{tpu_custom_call.1} parent=1 // pred_fallthru
      _
    // Predicated region
    $region18: #{tpu_custom_call.1} parent=1 // pred_check
      _
    $region19: #{tpu_custom_call.1} parent=1 // pred_check_branch
      %53 = sbr.rel (0) target = $region21
    $region20: #{tpu_custom_call.1} parent=1 // pred_region
      _
    $region21: #{tpu_custom_call.1} parent=1 // pred_fallthru
      _
    // Predicated region
    $region22: #{tpu_custom_call.1} parent=1 // pred_check
      _
    $region23: #{tpu_custom_call.1} parent=1 // pred_check_branch
      %55 = sbr.rel (0) target = $region25
    $region24: #{tpu_custom_call.1} parent=1 // pred_region
      %s57 = ssub.s32 1024, 1024
      %58 = vsyncadd [#allocation9], %s57
      %s59 = sshll.u32 [#allocation8], 4
      %s60 = int_to_ptr.vmem [resolvable:$true] %s59
      %65 = dma.hbm_to_vmem [thread:$0]  %s5, 1024, %s60, [#allocation9], 64, 64, 4
    $region25: #{tpu_custom_call.1} parent=1 // pred_fallthru
      _
    // Predicated region
    $region26: #{tpu_custom_call.1} parent=1 // pred_check
      _
    $region27: #{tpu_custom_call.1} parent=1 // pred_check_branch
      %67 = sbr.rel (0) target = $region29
    $region28: #{tpu_custom_call.1} parent=1 // pred_region
      _
    $region29: #{tpu_custom_call.1} parent=1 // pred_fallthru
      _
    // Predicated region
    $region30: #{tpu_custom_call.1} parent=1 // pred_check
      _
    $region31: #{tpu_custom_call.1} parent=1 // pred_check_branch
      %69 = sbr.rel (0) target = $region33
    $region32: #{tpu_custom_call.1} parent=1 // pred_region
      %70 = dma.done [#allocation3], 608
    $region33: #{tpu_custom_call.1} parent=1 // pred_fallthru
      _
    // Predicated region
    $region34: #{tpu_custom_call.1} parent=1 // pred_check
      _
    $region35: #{tpu_custom_call.1} parent=1 // pred_check_branch
      %72 = sbr.rel (0) target = $region37
    $region36: #{tpu_custom_call.1} parent=1 // pred_region
      %73 = dma.done [#allocation6], 18816
    $region37: #{tpu_custom_call.1} parent=1 // pred_fallthru
      _
    // Predicated region
    $region38: #{tpu_custom_call.1} parent=1 // pred_check
      _
    $region39: #{tpu_custom_call.1} parent=1 // pred_check_branch
      %75 = sbr.rel (0) target = $region41
    $region40: #{tpu_custom_call.1} parent=1 // pred_region
      %76 = dma.done [#allocation6], 1024
    $region41: #{tpu_custom_call.1} parent=1 // pred_fallthru
      _
    // Predicated region
    $region42: #{tpu_custom_call.1} parent=1 // pred_check
      _
    $region43: #{tpu_custom_call.1} parent=1 // pred_check_branch
      %78 = sbr.rel (0) target = $region45
    $region44: #{tpu_custom_call.1} parent=1 // pred_region
      %79 = dma.done [#allocation9], 1024
    $region45: #{tpu_custom_call.1} parent=1 // pred_fallthru
      _
    %v81 = vld [vmem:[#allocation2] sm:$0xff]
    %v82 = vld [vmem:[#allocation2 + $0x8] sm:$0xff]
    %v83 = vld [vmem:[#allocation2 + $0x10] sm:$0xff]
    %v84 = vld [vmem:[#allocation2 + $0x18] sm:$0xff]
    %v85 = vld [vmem:[#allocation2 + $0x20] sm:$0x3f]
    %v91 = vcombine.high %v81, %v81
    %v93 = vunpack.c.l.s4 1983009808
    %v94 = vunpack.c.0.s8 %v93
    %v95 = vlaneseq
    %v96 = vshrl.u32 %v95, 7
    %v97 = vsub.s32 %v94, %v96
    %v98 = vrot.slane %v81, %v97
    %v100 = vunpack.c.l.s4 1983009808
    %v101 = vunpack.c.0.s8 %v100
    %v102 = vlaneseq
    %v103 = vshrl.u32 %v102, 7
    %v104 = vsub.s32 %v101, %v103
    %v105 = vrot.slane %v91, %v104
    %v106 = vcombine.high %v98, %v98
    %v107 = vcombine.high %v105, %v105
    %v108 = vcombine.high %v82, %v82
    %v110 = vunpack.c.l.s4 1983009808
    %v111 = vunpack.c.0.s8 %v110
    %v112 = vlaneseq
    %v113 = vshrl.u32 %v112, 7
    %v114 = vsub.s32 %v111, %v113
    %v115 = vrot.slane %v82, %v114
    %v117 = vunpack.c.l.s4 1983009808
    %v118 = vunpack.c.0.s8 %v117
    %v119 = vlaneseq
    %v120 = vshrl.u32 %v119, 7
    %v121 = vsub.s32 %v118, %v120
    %v122 = vrot.slane %v108, %v121
    %v123 = vcombine.high %v115, %v115
    %v124 = vcombine.high %v122, %v122
    %v125 = vcombine.high %v83, %v83
    %v127 = vunpack.c.l.s4 1983009808
    %v128 = vunpack.c.0.s8 %v127
    %v129 = vlaneseq
    %v130 = vshrl.u32 %v129, 7
    %v131 = vsub.s32 %v128, %v130
    %v132 = vrot.slane %v83, %v131
    %v134 = vunpack.c.l.s4 1983009808
    %v135 = vunpack.c.0.s8 %v134
    %v136 = vlaneseq
    %v137 = vshrl.u32 %v136, 7
    %v138 = vsub.s32 %v135, %v137
    %v139 = vrot.slane %v125, %v138
    %v140 = vcombine.high %v132, %v132
    %v141 = vcombine.high %v139, %v139
    %v142 = vcombine.high %v84, %v84
    %v144 = vunpack.c.l.s4 1983009808
    %v145 = vunpack.c.0.s8 %v144
    %v146 = vlaneseq
    %v147 = vshrl.u32 %v146, 7
    %v148 = vsub.s32 %v145, %v147
    %v149 = vrot.slane %v84, %v148
    %v151 = vunpack.c.l.s4 1983009808
    %v152 = vunpack.c.0.s8 %v151
    %v153 = vlaneseq
    %v154 = vshrl.u32 %v153, 7
    %v155 = vsub.s32 %v152, %v154
    %v156 = vrot.slane %v142, %v155
    %v157 = vcombine.high %v149, %v149
    %v158 = vcombine.high %v156, %v156
    %v159 = vcombine.high %v85, %v85
    %v161 = vunpack.c.l.s4 1983009808
    %v162 = vunpack.c.0.s8 %v161
    %v163 = vlaneseq
    %v164 = vshrl.u32 %v163, 7
    %v165 = vsub.s32 %v162, %v164
    %v166 = vrot.slane %v85, %v165
    %v168 = vunpack.c.l.s4 1983009808
    %v169 = vunpack.c.0.s8 %v168
    %v170 = vlaneseq
    %v171 = vshrl.u32 %v170, 7
    %v172 = vsub.s32 %v169, %v171
    %v173 = vrot.slane %v159, %v172
    %v174 = vcombine.high %v166, %v166
    %v194 = vpack.c.bf16 %v98, %v98
    %v195 = vpack.c.bf16 %v106, %v106
    %v196 = vpack.c.bf16 %v105, %v105
    %v197 = vpack.c.bf16 %v107, %v107
    %v198 = vpack.c.bf16 %v115, %v115
    %v199 = vpack.c.bf16 %v123, %v123
    %v200 = vpack.c.bf16 %v122, %v122
    %v201 = vpack.c.bf16 %v124, %v124
    %v202 = vpack.c.bf16 %v132, %v132
    %v203 = vpack.c.bf16 %v140, %v140
    %v204 = vpack.c.bf16 %v139, %v139
    %v205 = vpack.c.bf16 %v141, %v141
    %v206 = vpack.c.bf16 %v149, %v149
    %v207 = vpack.c.bf16 %v157, %v157
    %v208 = vpack.c.bf16 %v156, %v156
    %v209 = vpack.c.bf16 %v158, %v158
    %v210 = vpack.c.bf16 %v166, %v166
    %v211 = vpack.c.bf16 %v174, %v174
    %v212 = vpack.c.bf16 %v173, %v173
    %v213 = vld [vmem:[#allocation5] sm:$0xf]
    %v214 = vld [vmem:[#allocation5 + $0x4] sm:$0xf]
    %v215 = vld [vmem:[#allocation5 + $0x8] sm:$0xf]
    %v216 = vld [vmem:[#allocation5 + $0xc] sm:$0xf]
    %v217 = vld [vmem:[#allocation5 + $0x10] sm:$0xf]
    %v218 = vld [vmem:[#allocation5 + $0x14] sm:$0xf]
    %v219 = vld [vmem:[#allocation5 + $0x18] sm:$0xf]
    %v220 = vld [vmem:[#allocation5 + $0x1c] sm:$0xf]
    %v221 = vld [vmem:[#allocation5 + $0x20] sm:$0xf]
    %v222 = vld [vmem:[#allocation5 + $0x24] sm:$0xf]
    %v223 = vld [vmem:[#allocation5 + $0x28] sm:$0xf]
    %v224 = vld [vmem:[#allocation5 + $0x2c] sm:$0xf]
    %v225 = vld [vmem:[#allocation5 + $0x30] sm:$0xf]
    %v226 = vld [vmem:[#allocation5 + $0x34] sm:$0xf]
    %v227 = vld [vmem:[#allocation5 + $0x38] sm:$0xf]
    %v228 = vld [vmem:[#allocation5 + $0x3c] sm:$0xf]
    %v229 = vld [vmem:[#allocation5 + $0x40] sm:$0xf]
    %v230 = vld [vmem:[#allocation5 + $0x44] sm:$0xf]
    %v231 = vld [vmem:[#allocation5 + $0x48] sm:$0xf]
    %v232 = vld [vmem:[#allocation5 + $0x4c] sm:$0xf]
    %v233 = vld [vmem:[#allocation5 + $0x50] sm:$0xf]
    %v234 = vld [vmem:[#allocation5 + $0x54] sm:$0xf]
    %v235 = vld [vmem:[#allocation5 + $0x58] sm:$0xf]
    %v236 = vld [vmem:[#allocation5 + $0x5c] sm:$0xf]
    %v237 = vld [vmem:[#allocation5 + $0x60] sm:$0xf]
    %v238 = vld [vmem:[#allocation5 + $0x64] sm:$0xf]
    %v239 = vld [vmem:[#allocation5 + $0x68] sm:$0xf]
    %v240 = vld [vmem:[#allocation5 + $0x6c] sm:$0xf]
    %v241 = vld [vmem:[#allocation5 + $0x70] sm:$0xf]
    %v242 = vld [vmem:[#allocation5 + $0x74] sm:$0xf]
    %v243 = vld [vmem:[#allocation5 + $0x78] sm:$0xf]
    %v244 = vld [vmem:[#allocation5 + $0x7c] sm:$0xf]
    %v245 = vld [vmem:[#allocation5 + $0x80] sm:$0xf]
    %v246 = vld [vmem:[#allocation5 + $0x84] sm:$0xf]
    %v247 = vld [vmem:[#allocation5 + $0x88] sm:$0xf]
    %v248 = vld [vmem:[#allocation5 + $0x8c] sm:$0xf]
    %v249 = vld [vmem:[#allocation5 + $0x90] sm:$0xf]
    %v250 = vld [vmem:[#allocation5 + $0x94] sm:$0xf]
    %v251 = vld [vmem:[#allocation5 + $0x98] sm:$0xf]
    %v252 = vld [vmem:[#allocation5 + $0x9c] sm:$0xf]
    %v253 = vld [vmem:[#allocation5 + $0xa0] sm:$0xf]
    %v254 = vld [vmem:[#allocation5 + $0xa4] sm:$0xf]
    %v255 = vld [vmem:[#allocation5 + $0xa8] sm:$0xf]
    %v256 = vld [vmem:[#allocation5 + $0xac] sm:$0xf]
    %v257 = vld [vmem:[#allocation5 + $0xb0] sm:$0xf]
    %v258 = vld [vmem:[#allocation5 + $0xb4] sm:$0xf]
    %v259 = vld [vmem:[#allocation5 + $0xb8] sm:$0xf]
    %v260 = vld [vmem:[#allocation5 + $0xbc] sm:$0xf]
    %v261 = vld [vmem:[#allocation5 + $0xc0] sm:$0xf]
    %v262 = vld [vmem:[#allocation5 + $0xc4] sm:$0xf]
    %v263 = vld [vmem:[#allocation5 + $0xc8] sm:$0xf]
    %v264 = vld [vmem:[#allocation5 + $0xcc] sm:$0xf]
    %v265 = vld [vmem:[#allocation5 + $0xd0] sm:$0xf]
    %v266 = vld [vmem:[#allocation5 + $0xd4] sm:$0xf]
    %v267 = vld [vmem:[#allocation5 + $0xd8] sm:$0xf]
    %v268 = vld [vmem:[#allocation5 + $0xdc] sm:$0xf]
    %v269 = vld [vmem:[#allocation5 + $0xe0] sm:$0xf]
    %v270 = vld [vmem:[#allocation5 + $0xe4] sm:$0xf]
    %v271 = vld [vmem:[#allocation5 + $0xe8] sm:$0xf]
    %v272 = vld [vmem:[#allocation5 + $0xec] sm:$0xf]
    %v273 = vld [vmem:[#allocation5 + $0xf0] sm:$0xf]
    %v274 = vld [vmem:[#allocation5 + $0xf4] sm:$0xf]
    %v275 = vld [vmem:[#allocation5 + $0xf8] sm:$0xf]
    %v276 = vld [vmem:[#allocation5 + $0xfc] sm:$0xf]
    %v277 = vld [vmem:[#allocation5 + $0x100] sm:$0xf]
    %v278 = vld [vmem:[#allocation5 + $0x104] sm:$0xf]
    %v279 = vld [vmem:[#allocation5 + $0x108] sm:$0xf]
    %v280 = vld [vmem:[#allocation5 + $0x10c] sm:$0xf]
    %v281 = vld [vmem:[#allocation5 + $0x110] sm:$0xf]
    %v282 = vld [vmem:[#allocation5 + $0x114] sm:$0xf]
    %v283 = vld [vmem:[#allocation5 + $0x118] sm:$0xf]
    %v284 = vld [vmem:[#allocation5 + $0x11c] sm:$0xf]
    %v285 = vld [vmem:[#allocation5 + $0x120] sm:$0xf]
    %v286 = vld [vmem:[#allocation5 + $0x124] sm:$0xf]
    %v287 = vld [vmem:[#allocation5 + $0x128] sm:$0xf]
    %v288 = vld [vmem:[#allocation5 + $0x12c] sm:$0xf]
    %v289 = vld [vmem:[#allocation5 + $0x130] sm:$0xf]
    %v290 = vld [vmem:[#allocation5 + $0x134] sm:$0xf]
    %v291 = vld [vmem:[#allocation5 + $0x138] sm:$0xf]
    %v292 = vld [vmem:[#allocation5 + $0x13c] sm:$0xf]
    %v293 = vld [vmem:[#allocation5 + $0x140] sm:$0xf]
    %v294 = vld [vmem:[#allocation5 + $0x144] sm:$0xf]
    %v295 = vld [vmem:[#allocation5 + $0x148] sm:$0xf]
    %v296 = vld [vmem:[#allocation5 + $0x14c] sm:$0xf]
    %v297 = vld [vmem:[#allocation5 + $0x150] sm:$0xf]
    %v298 = vld [vmem:[#allocation5 + $0x154] sm:$0xf]
    %v299 = vld [vmem:[#allocation5 + $0x158] sm:$0xf]
    %v300 = vld [vmem:[#allocation5 + $0x15c] sm:$0xf]
    %v301 = vld [vmem:[#allocation5 + $0x160] sm:$0xf]
    %v302 = vld [vmem:[#allocation5 + $0x164] sm:$0xf]
    %v303 = vld [vmem:[#allocation5 + $0x168] sm:$0xf]
    %v304 = vld [vmem:[#allocation5 + $0x16c] sm:$0xf]
    %v305 = vld [vmem:[#allocation5 + $0x170] sm:$0xf]
    %v306 = vld [vmem:[#allocation5 + $0x174] sm:$0xf]
    %v307 = vld [vmem:[#allocation5 + $0x178] sm:$0xf]
    %v308 = vld [vmem:[#allocation5 + $0x17c] sm:$0xf]
    %v309 = vld [vmem:[#allocation5 + $0x180] sm:$0xf]
    %v310 = vld [vmem:[#allocation5 + $0x184] sm:$0xf]
    %v311 = vld [vmem:[#allocation5 + $0x188] sm:$0xf]
    %v312 = vld [vmem:[#allocation5 + $0x18c] sm:$0xf]
    %v313 = vld [vmem:[#allocation5 + $0x190] sm:$0xf]
    %v314 = vld [vmem:[#allocation5 + $0x194] sm:$0xf]
    %v315 = vld [vmem:[#allocation5 + $0x198] sm:$0xf]
    %v316 = vld [vmem:[#allocation5 + $0x19c] sm:$0xf]
    %v317 = vld [vmem:[#allocation5 + $0x1a0] sm:$0xf]
    %v318 = vld [vmem:[#allocation5 + $0x1a4] sm:$0xf]
    %v319 = vld [vmem:[#allocation5 + $0x1a8] sm:$0xf]
    %v320 = vld [vmem:[#allocation5 + $0x1ac] sm:$0xf]
    %v321 = vld [vmem:[#allocation5 + $0x1b0] sm:$0xf]
    %v322 = vld [vmem:[#allocation5 + $0x1b4] sm:$0xf]
    %v323 = vld [vmem:[#allocation5 + $0x1b8] sm:$0xf]
    %v324 = vld [vmem:[#allocation5 + $0x1bc] sm:$0xf]
    %v325 = vld [vmem:[#allocation5 + $0x1c0] sm:$0xf]
    %v326 = vld [vmem:[#allocation5 + $0x1c4] sm:$0xf]
    %v327 = vld [vmem:[#allocation5 + $0x1c8] sm:$0xf]
    %v328 = vld [vmem:[#allocation5 + $0x1cc] sm:$0xf]
    %v329 = vld [vmem:[#allocation5 + $0x1d0] sm:$0xf]
    %v330 = vld [vmem:[#allocation5 + $0x1d4] sm:$0xf]
    %v331 = vld [vmem:[#allocation5 + $0x1d8] sm:$0xf]
    %v332 = vld [vmem:[#allocation5 + $0x1dc] sm:$0xf]
    %v333 = vld [vmem:[#allocation5 + $0x1e0] sm:$0xf]
    %v334 = vld [vmem:[#allocation5 + $0x1e4] sm:$0xf]
    %v335 = vld [vmem:[#allocation5 + $0x1e8] sm:$0xf]
    %v336 = vld [vmem:[#allocation5 + $0x1ec] sm:$0xf]
    %v337 = vld [vmem:[#allocation5 + $0x1f0] sm:$0xf]
    %v338 = vld [vmem:[#allocation5 + $0x1f4] sm:$0xf]
    %v339 = vld [vmem:[#allocation5 + $0x1f8] sm:$0xf]
    %v340 = vld [vmem:[#allocation5 + $0x1fc] sm:$0xf]
    %v341 = vld [vmem:[#allocation5 + $0x200] sm:$0xf]
    %v342 = vld [vmem:[#allocation5 + $0x204] sm:$0xf]
    %v343 = vld [vmem:[#allocation5 + $0x208] sm:$0xf]
    %v344 = vld [vmem:[#allocation5 + $0x20c] sm:$0xf]
    %v345 = vld [vmem:[#allocation5 + $0x210] sm:$0xf]
    %v346 = vld [vmem:[#allocation5 + $0x214] sm:$0xf]
    %v347 = vld [vmem:[#allocation5 + $0x218] sm:$0xf]
    %v348 = vld [vmem:[#allocation5 + $0x21c] sm:$0xf]
    %v349 = vld [vmem:[#allocation5 + $0x220] sm:$0xf]
    %v350 = vld [vmem:[#allocation5 + $0x224] sm:$0xf]
    %v351 = vld [vmem:[#allocation5 + $0x228] sm:$0xf]
    %v352 = vld [vmem:[#allocation5 + $0x22c] sm:$0xf]
    %v353 = vld [vmem:[#allocation5 + $0x230] sm:$0xf]
    %v354 = vld [vmem:[#allocation5 + $0x234] sm:$0xf]
    %v355 = vld [vmem:[#allocation5 + $0x238] sm:$0xf]
    %v356 = vld [vmem:[#allocation5 + $0x23c] sm:$0xf]
    %v357 = vld [vmem:[#allocation5 + $0x240] sm:$0xf]
    %v358 = vld [vmem:[#allocation5 + $0x244] sm:$0xf]
    %v359 = vld [vmem:[#allocation5 + $0x248] sm:$0xf]
    %v360 = vld [vmem:[#allocation5 + $0x24c] sm:$0xf]
    %v361 = vld [vmem:[#allocation5 + $0x250] sm:$0xf]
    %v362 = vld [vmem:[#allocation5 + $0x254] sm:$0xf]
    %v363 = vld [vmem:[#allocation5 + $0x258] sm:$0xf]
    %v364 = vld [vmem:[#allocation5 + $0x25c] sm:$0xf]
    %v365 = vld [vmem:[#allocation5 + $0x260] sm:$0xf]
    %v366 = vld [vmem:[#allocation5 + $0x264] sm:$0xf]
    %v367 = vld [vmem:[#allocation5 + $0x268] sm:$0xf]
    %v368 = vld [vmem:[#allocation5 + $0x26c] sm:$0xf]
    %v369 = vld [vmem:[#allocation5 + $0x270] sm:$0xf]
    %v370 = vld [vmem:[#allocation5 + $0x274] sm:$0xf]
    %v371 = vld [vmem:[#allocation5 + $0x278] sm:$0xf]
    %v372 = vld [vmem:[#allocation5 + $0x27c] sm:$0xf]
    %v373 = vld [vmem:[#allocation5 + $0x280] sm:$0xf]
    %v374 = vld [vmem:[#allocation5 + $0x284] sm:$0xf]
    %v375 = vld [vmem:[#allocation5 + $0x288] sm:$0xf]
    %v376 = vld [vmem:[#allocation5 + $0x28c] sm:$0xf]
    %v377 = vld [vmem:[#allocation5 + $0x290] sm:$0xf]
    %v378 = vld [vmem:[#allocation5 + $0x294] sm:$0xf]
    %v379 = vld [vmem:[#allocation5 + $0x298] sm:$0xf]
    %v380 = vld [vmem:[#allocation5 + $0x29c] sm:$0xf]
    %v381 = vld [vmem:[#allocation5 + $0x2a0] sm:$0xf]
    %v382 = vld [vmem:[#allocation5 + $0x2a4] sm:$0xf]
    %v383 = vld [vmem:[#allocation5 + $0x2a8] sm:$0xf]
    %v384 = vld [vmem:[#allocation5 + $0x2ac] sm:$0xf]
    %v385 = vld [vmem:[#allocation5 + $0x2b0] sm:$0xf]
    %v386 = vld [vmem:[#allocation5 + $0x2b4] sm:$0xf]
    %v387 = vld [vmem:[#allocation5 + $0x2b8] sm:$0xf]
    %v388 = vld [vmem:[#allocation5 + $0x2bc] sm:$0xf]
    %v389 = vld [vmem:[#allocation5 + $0x2c0] sm:$0xf]
    %v390 = vld [vmem:[#allocation5 + $0x2c4] sm:$0xf]
    %v391 = vld [vmem:[#allocation5 + $0x2c8] sm:$0xf]
    %v392 = vld [vmem:[#allocation5 + $0x2cc] sm:$0xf]
    %v393 = vld [vmem:[#allocation5 + $0x2d0] sm:$0xf]
    %v394 = vld [vmem:[#allocation5 + $0x2d4] sm:$0xf]
    %v395 = vld [vmem:[#allocation5 + $0x2d8] sm:$0xf]
    %v396 = vld [vmem:[#allocation5 + $0x2dc] sm:$0xf]
    %v397 = vld [vmem:[#allocation5 + $0x2e0] sm:$0xf]
    %v398 = vld [vmem:[#allocation5 + $0x2e4] sm:$0xf]
    %v399 = vld [vmem:[#allocation5 + $0x2e8] sm:$0xf]
    %v400 = vld [vmem:[#allocation5 + $0x2ec] sm:$0xf]
    %v401 = vld [vmem:[#allocation5 + $0x2f0] sm:$0xf]
    %v402 = vld [vmem:[#allocation5 + $0x2f4] sm:$0xf]
    %v403 = vld [vmem:[#allocation5 + $0x2f8] sm:$0xf]
    %v404 = vld [vmem:[#allocation5 + $0x2fc] sm:$0xf]
    %v405 = vld [vmem:[#allocation5 + $0x300] sm:$0xf]
    %v406 = vld [vmem:[#allocation5 + $0x304] sm:$0xf]
    %v407 = vld [vmem:[#allocation5 + $0x308] sm:$0xf]
    %v408 = vld [vmem:[#allocation5 + $0x30c] sm:$0xf]
    %v409 = vld [vmem:[#allocation5 + $0x310] sm:$0xf]
    %v410 = vld [vmem:[#allocation5 + $0x314] sm:$0xf]
    %v411 = vld [vmem:[#allocation5 + $0x318] sm:$0xf]
    %v412 = vld [vmem:[#allocation5 + $0x31c] sm:$0xf]
    %v413 = vld [vmem:[#allocation5 + $0x320] sm:$0xf]
    %v414 = vld [vmem:[#allocation5 + $0x324] sm:$0xf]
    %v415 = vld [vmem:[#allocation5 + $0x328] sm:$0xf]
    %v416 = vld [vmem:[#allocation5 + $0x32c] sm:$0xf]
    %v417 = vld [vmem:[#allocation5 + $0x330] sm:$0xf]
    %v418 = vld [vmem:[#allocation5 + $0x334] sm:$0xf]
    %v419 = vld [vmem:[#allocation5 + $0x338] sm:$0xf]
    %v420 = vld [vmem:[#allocation5 + $0x33c] sm:$0xf]
    %v421 = vld [vmem:[#allocation5 + $0x340] sm:$0xf]
    %v422 = vld [vmem:[#allocation5 + $0x344] sm:$0xf]
    %v423 = vld [vmem:[#allocation5 + $0x348] sm:$0xf]
    %v424 = vld [vmem:[#allocation5 + $0x34c] sm:$0xf]
    %v425 = vld [vmem:[#allocation5 + $0x350] sm:$0xf]
    %v426 = vld [vmem:[#allocation5 + $0x354] sm:$0xf]
    %v427 = vld [vmem:[#allocation5 + $0x358] sm:$0xf]
    %v428 = vld [vmem:[#allocation5 + $0x35c] sm:$0xf]
    %v429 = vld [vmem:[#allocation5 + $0x360] sm:$0xf]
    %v430 = vld [vmem:[#allocation5 + $0x364] sm:$0xf]
    %v431 = vld [vmem:[#allocation5 + $0x368] sm:$0xf]
    %v432 = vld [vmem:[#allocation5 + $0x36c] sm:$0xf]
    %v433 = vld [vmem:[#allocation5 + $0x370] sm:$0xf]
    %v434 = vld [vmem:[#allocation5 + $0x374] sm:$0xf]
    %v435 = vld [vmem:[#allocation5 + $0x378] sm:$0xf]
    %v436 = vld [vmem:[#allocation5 + $0x37c] sm:$0xf]
    %v437 = vld [vmem:[#allocation5 + $0x380] sm:$0xf]
    %v438 = vld [vmem:[#allocation5 + $0x384] sm:$0xf]
    %v439 = vld [vmem:[#allocation5 + $0x388] sm:$0xf]
    %v440 = vld [vmem:[#allocation5 + $0x38c] sm:$0xf]
    %v441 = vld [vmem:[#allocation5 + $0x390] sm:$0xf]
    %v442 = vld [vmem:[#allocation5 + $0x394] sm:$0xf]
    %v443 = vld [vmem:[#allocation5 + $0x398] sm:$0xf]
    %v444 = vld [vmem:[#allocation5 + $0x39c] sm:$0xf]
    %v445 = vld [vmem:[#allocation5 + $0x3a0] sm:$0xf]
    %v446 = vld [vmem:[#allocation5 + $0x3a4] sm:$0xf]
    %v447 = vld [vmem:[#allocation5 + $0x3a8] sm:$0xf]
    %v448 = vld [vmem:[#allocation5 + $0x3ac] sm:$0xf]
    %v449 = vld [vmem:[#allocation5 + $0x3b0] sm:$0xf]
    %v450 = vld [vmem:[#allocation5 + $0x3b4] sm:$0xf]
    %v451 = vld [vmem:[#allocation5 + $0x3b8] sm:$0xf]
    %v452 = vld [vmem:[#allocation5 + $0x3bc] sm:$0xf]
    %v453 = vld [vmem:[#allocation5 + $0x3c0] sm:$0xf]
    %v454 = vld [vmem:[#allocation5 + $0x3c4] sm:$0xf]
    %v455 = vld [vmem:[#allocation5 + $0x3c8] sm:$0xf]
    %v456 = vld [vmem:[#allocation5 + $0x3cc] sm:$0xf]
    %v457 = vld [vmem:[#allocation5 + $0x3d0] sm:$0xf]
    %v458 = vld [vmem:[#allocation5 + $0x3d4] sm:$0xf]
    %v459 = vld [vmem:[#allocation5 + $0x3d8] sm:$0xf]
    %v460 = vld [vmem:[#allocation5 + $0x3dc] sm:$0xf]
    %v461 = vld [vmem:[#allocation5 + $0x3e0] sm:$0xf]
    %v462 = vld [vmem:[#allocation5 + $0x3e4] sm:$0xf]
    %v463 = vld [vmem:[#allocation5 + $0x3e8] sm:$0xf]
    %v464 = vld [vmem:[#allocation5 + $0x3ec] sm:$0xf]
    %v465 = vld [vmem:[#allocation5 + $0x3f0] sm:$0xf]
    %v466 = vld [vmem:[#allocation5 + $0x3f4] sm:$0xf]
    %v467 = vld [vmem:[#allocation5 + $0x3f8] sm:$0xf]
    %v468 = vld [vmem:[#allocation5 + $0x3fc] sm:$0xf]
    %v469 = vld [vmem:[#allocation5 + $0x400] sm:$0xf]
    %v470 = vld [vmem:[#allocation5 + $0x404] sm:$0xf]
    %v471 = vld [vmem:[#allocation5 + $0x408] sm:$0xf]
    %v472 = vld [vmem:[#allocation5 + $0x40c] sm:$0xf]
    %v473 = vld [vmem:[#allocation5 + $0x410] sm:$0xf]
    %v474 = vld [vmem:[#allocation5 + $0x414] sm:$0xf]
    %v475 = vld [vmem:[#allocation5 + $0x418] sm:$0xf]
    %v476 = vld [vmem:[#allocation5 + $0x41c] sm:$0xf]
    %v477 = vld [vmem:[#allocation5 + $0x420] sm:$0xf]
    %v478 = vld [vmem:[#allocation5 + $0x424] sm:$0xf]
    %v479 = vld [vmem:[#allocation5 + $0x428] sm:$0xf]
    %v480 = vld [vmem:[#allocation5 + $0x42c] sm:$0xf]
    %v481 = vld [vmem:[#allocation5 + $0x430] sm:$0xf]
    %v482 = vld [vmem:[#allocation5 + $0x434] sm:$0xf]
    %v483 = vld [vmem:[#allocation5 + $0x438] sm:$0xf]
    %v484 = vld [vmem:[#allocation5 + $0x43c] sm:$0xf]
    %v485 = vld [vmem:[#allocation5 + $0x440] sm:$0xf]
    %v486 = vld [vmem:[#allocation5 + $0x444] sm:$0xf]
    %v487 = vld [vmem:[#allocation5 + $0x448] sm:$0xf]
    %v488 = vld [vmem:[#allocation5 + $0x44c] sm:$0xf]
    %v489 = vld [vmem:[#allocation5 + $0x450] sm:$0xf]
    %v490 = vld [vmem:[#allocation5 + $0x454] sm:$0xf]
    %v491 = vld [vmem:[#allocation5 + $0x458] sm:$0xf]
    %v492 = vld [vmem:[#allocation5 + $0x45c] sm:$0xf]
    %v493 = vld [vmem:[#allocation5 + $0x460] sm:$0xf]
    %v494 = vld [vmem:[#allocation5 + $0x464] sm:$0xf]
    %v495 = vld [vmem:[#allocation5 + $0x468] sm:$0xf]
    %v496 = vld [vmem:[#allocation5 + $0x46c] sm:$0xf]
    %v497 = vld [vmem:[#allocation5 + $0x470] sm:$0xf]
    %v498 = vld [vmem:[#allocation5 + $0x474] sm:$0xf]
    %v499 = vld [vmem:[#allocation5 + $0x478] sm:$0xf]
    %v500 = vld [vmem:[#allocation5 + $0x47c] sm:$0xf]
    %v501 = vld [vmem:[#allocation5 + $0x480] sm:$0xf]
    %v502 = vld [vmem:[#allocation5 + $0x484] sm:$0xf]
    %v503 = vld [vmem:[#allocation5 + $0x488] sm:$0xf]
    %v504 = vld [vmem:[#allocation5 + $0x48c] sm:$0xf]
    %v505 = vld [vmem:[#allocation5 + $0x490] sm:$0xf]
    %v506 = vld [vmem:[#allocation5 + $0x494] sm:$0xf]
    %v507 = vld [vmem:[%s2] sm:$0x1]
    %v509 = vlaneseq
    %v510 = vshrl.u32 %v509, 7
    %v511 = vsub.s32 0, %v510
    %v512 = vrot.slane %v507, %v511
    %v808 = vunpack.c.l.b16 %v213
    %v809 = vunpack.c.l.b16 %v214
    %v810 = vunpack.c.l.b16 %v215
    %v811 = vunpack.c.l.b16 %v216
    %v812 = vunpack.c.l.b16 %v217
    %v813 = vunpack.c.l.b16 %v218
    %v814 = vunpack.c.l.b16 %v219
    %v815 = vunpack.c.l.b16 %v220
    %v816 = vunpack.c.l.b16 %v221
    %v817 = vunpack.c.l.b16 %v222
    %v818 = vunpack.c.l.b16 %v223
    %v819 = vunpack.c.l.b16 %v224
    %v820 = vunpack.c.l.b16 %v225
    %v821 = vunpack.c.l.b16 %v226
    %v822 = vunpack.c.l.b16 %v227
    %v823 = vunpack.c.l.b16 %v228
    %v824 = vunpack.c.l.b16 %v229
    %v825 = vunpack.c.l.b16 %v230
    %v826 = vunpack.c.l.b16 %v231
    %v827 = vunpack.c.l.b16 %v232
    %v828 = vunpack.c.l.b16 %v233
    %v829 = vunpack.c.l.b16 %v234
    %v830 = vunpack.c.l.b16 %v235
    %v831 = vunpack.c.l.b16 %v236
    %v832 = vunpack.c.l.b16 %v237
    %v833 = vunpack.c.l.b16 %v238
    %v834 = vunpack.c.l.b16 %v239
    %v835 = vunpack.c.l.b16 %v240
    %v836 = vunpack.c.l.b16 %v241
    %v837 = vunpack.c.l.b16 %v242
    %v838 = vunpack.c.l.b16 %v243
    %v839 = vunpack.c.l.b16 %v244
    %v840 = vunpack.c.l.b16 %v245
    %v841 = vunpack.c.l.b16 %v246
    %v842 = vunpack.c.l.b16 %v247
    %v843 = vunpack.c.l.b16 %v248
    %v844 = vunpack.c.l.b16 %v249
    %v845 = vunpack.c.l.b16 %v250
    %v846 = vunpack.c.l.b16 %v251
    %v847 = vunpack.c.l.b16 %v252
    %v848 = vunpack.c.l.b16 %v253
    %v849 = vunpack.c.l.b16 %v254
    %v850 = vunpack.c.l.b16 %v255
    %v851 = vunpack.c.l.b16 %v256
    %v852 = vunpack.c.l.b16 %v257
    %v853 = vunpack.c.l.b16 %v258
    %v854 = vunpack.c.l.b16 %v259
    %v855 = vunpack.c.l.b16 %v260
    %v856 = vunpack.c.l.b16 %v261
    %v857 = vunpack.c.l.b16 %v262
    %v858 = vunpack.c.l.b16 %v263
    %v859 = vunpack.c.l.b16 %v264
    %v860 = vunpack.c.l.b16 %v265
    %v861 = vunpack.c.l.b16 %v266
    %v862 = vunpack.c.l.b16 %v267
    %v863 = vunpack.c.l.b16 %v268
    %v864 = vunpack.c.l.b16 %v269
    %v865 = vunpack.c.l.b16 %v270
    %v866 = vunpack.c.l.b16 %v271
    %v867 = vunpack.c.l.b16 %v272
    %v868 = vunpack.c.l.b16 %v273
    %v869 = vunpack.c.l.b16 %v274
    %v870 = vunpack.c.l.b16 %v275
    %v871 = vunpack.c.l.b16 %v276
    %v872 = vunpack.c.l.b16 %v277
    %v873 = vunpack.c.l.b16 %v278
    %v874 = vunpack.c.l.b16 %v279
    %v875 = vunpack.c.l.b16 %v280
    %v876 = vunpack.c.l.b16 %v281
    %v877 = vunpack.c.l.b16 %v282
    %v878 = vunpack.c.l.b16 %v283
    %v879 = vunpack.c.l.b16 %v284
    %v880 = vunpack.c.l.b16 %v285
    %v881 = vunpack.c.l.b16 %v286
    %v882 = vunpack.c.l.b16 %v287
    %v883 = vunpack.c.l.b16 %v288
    %v884 = vunpack.c.l.b16 %v289
    %v885 = vunpack.c.l.b16 %v290
    %v886 = vunpack.c.l.b16 %v291
    %v887 = vunpack.c.l.b16 %v292
    %v888 = vunpack.c.l.b16 %v293
    %v889 = vunpack.c.l.b16 %v294
    %v890 = vunpack.c.l.b16 %v295
    %v891 = vunpack.c.l.b16 %v296
    %v892 = vunpack.c.l.b16 %v297
    %v893 = vunpack.c.l.b16 %v298
    %v894 = vunpack.c.l.b16 %v299
    %v895 = vunpack.c.l.b16 %v300
    %v896 = vunpack.c.l.b16 %v301
    %v897 = vunpack.c.l.b16 %v302
    %v898 = vunpack.c.l.b16 %v303
    %v899 = vunpack.c.l.b16 %v304
    %v900 = vunpack.c.l.b16 %v305
    %v901 = vunpack.c.l.b16 %v306
    %v902 = vunpack.c.l.b16 %v307
    %v903 = vunpack.c.l.b16 %v308
    %v904 = vunpack.c.l.b16 %v309
    %v905 = vunpack.c.l.b16 %v310
    %v906 = vunpack.c.l.b16 %v311
    %v907 = vunpack.c.l.b16 %v312
    %v908 = vunpack.c.l.b16 %v313
    %v909 = vunpack.c.l.b16 %v314
    %v910 = vunpack.c.l.b16 %v315
    %v911 = vunpack.c.l.b16 %v316
    %v912 = vunpack.c.l.b16 %v317
    %v913 = vunpack.c.l.b16 %v318
    %v914 = vunpack.c.l.b16 %v319
    %v915 = vunpack.c.l.b16 %v320
    %v916 = vunpack.c.l.b16 %v321
    %v917 = vunpack.c.l.b16 %v322
    %v918 = vunpack.c.l.b16 %v323
    %v919 = vunpack.c.l.b16 %v324
    %v920 = vunpack.c.l.b16 %v325
    %v921 = vunpack.c.l.b16 %v326
    %v922 = vunpack.c.l.b16 %v327
    %v923 = vunpack.c.l.b16 %v328
    %v924 = vunpack.c.l.b16 %v329
    %v925 = vunpack.c.l.b16 %v330
    %v926 = vunpack.c.l.b16 %v331
    %v927 = vunpack.c.l.b16 %v332
    %v928 = vunpack.c.l.b16 %v333
    %v929 = vunpack.c.l.b16 %v334
    %v930 = vunpack.c.l.b16 %v335
    %v931 = vunpack.c.l.b16 %v336
    %v932 = vunpack.c.l.b16 %v337
    %v933 = vunpack.c.l.b16 %v338
    %v934 = vunpack.c.l.b16 %v339
    %v935 = vunpack.c.l.b16 %v340
    %v936 = vunpack.c.l.b16 %v341
    %v937 = vunpack.c.l.b16 %v342
    %v938 = vunpack.c.l.b16 %v343
    %v939 = vunpack.c.l.b16 %v344
    %v940 = vunpack.c.l.b16 %v345
    %v941 = vunpack.c.l.b16 %v346
    %v942 = vunpack.c.l.b16 %v347
    %v943 = vunpack.c.l.b16 %v348
    %v944 = vunpack.c.l.b16 %v349
    %v945 = vunpack.c.l.b16 %v350
    %v946 = vunpack.c.l.b16 %v351
    %v947 = vunpack.c.l.b16 %v352
    %v948 = vunpack.c.l.b16 %v353
    %v949 = vunpack.c.l.b16 %v354
    %v950 = vunpack.c.l.b16 %v355
    %v951 = vunpack.c.l.b16 %v356
    %v952 = vunpack.c.l.b16 %v357
    %v953 = vunpack.c.l.b16 %v358
    %v954 = vunpack.c.l.b16 %v359
    %v955 = vunpack.c.l.b16 %v360
    %v956 = vunpack.c.l.b16 %v361
    %v957 = vunpack.c.l.b16 %v362
    %v958 = vunpack.c.l.b16 %v363
    %v959 = vunpack.c.l.b16 %v364
    %v960 = vunpack.c.l.b16 %v365
    %v961 = vunpack.c.l.b16 %v366
    %v962 = vunpack.c.l.b16 %v367
    %v963 = vunpack.c.l.b16 %v368
    %v964 = vunpack.c.l.b16 %v369
    %v965 = vunpack.c.l.b16 %v370
    %v966 = vunpack.c.l.b16 %v371
    %v967 = vunpack.c.l.b16 %v372
    %v968 = vunpack.c.l.b16 %v373
    %v969 = vunpack.c.l.b16 %v374
    %v970 = vunpack.c.l.b16 %v375
    %v971 = vunpack.c.l.b16 %v376
    %v972 = vunpack.c.l.b16 %v377
    %v973 = vunpack.c.l.b16 %v378
    %v974 = vunpack.c.l.b16 %v379
    %v975 = vunpack.c.l.b16 %v380
    %v976 = vunpack.c.l.b16 %v381
    %v977 = vunpack.c.l.b16 %v382
    %v978 = vunpack.c.l.b16 %v383
    %v979 = vunpack.c.l.b16 %v384
    %v980 = vunpack.c.l.b16 %v385
    %v981 = vunpack.c.l.b16 %v386
    %v982 = vunpack.c.l.b16 %v387
    %v983 = vunpack.c.l.b16 %v388
    %v984 = vunpack.c.l.b16 %v389
    %v985 = vunpack.c.l.b16 %v390
    %v986 = vunpack.c.l.b16 %v391
    %v987 = vunpack.c.l.b16 %v392
    %v988 = vunpack.c.l.b16 %v393
    %v989 = vunpack.c.l.b16 %v394
    %v990 = vunpack.c.l.b16 %v395
    %v991 = vunpack.c.l.b16 %v396
    %v992 = vunpack.c.l.b16 %v397
    %v993 = vunpack.c.l.b16 %v398
    %v994 = vunpack.c.l.b16 %v399
    %v995 = vunpack.c.l.b16 %v400
    %v996 = vunpack.c.l.b16 %v401
    %v997 = vunpack.c.l.b16 %v402
    %v998 = vunpack.c.l.b16 %v403
    %v999 = vunpack.c.l.b16 %v404
    %v1000 = vunpack.c.l.b16 %v405
    %v1001 = vunpack.c.l.b16 %v406
    %v1002 = vunpack.c.l.b16 %v407
    %v1003 = vunpack.c.l.b16 %v408
    %v1004 = vunpack.c.l.b16 %v409
    %v1005 = vunpack.c.l.b16 %v410
    %v1006 = vunpack.c.l.b16 %v411
    %v1007 = vunpack.c.l.b16 %v412
    %v1008 = vunpack.c.l.b16 %v413
    %v1009 = vunpack.c.l.b16 %v414
    %v1010 = vunpack.c.l.b16 %v415
    %v1011 = vunpack.c.l.b16 %v416
    %v1012 = vunpack.c.l.b16 %v417
    %v1013 = vunpack.c.l.b16 %v418
    %v1014 = vunpack.c.l.b16 %v419
    %v1015 = vunpack.c.l.b16 %v420
    %v1016 = vunpack.c.l.b16 %v421
    %v1017 = vunpack.c.l.b16 %v422
    %v1018 = vunpack.c.l.b16 %v423
    %v1019 = vunpack.c.l.b16 %v424
    %v1020 = vunpack.c.l.b16 %v425
    %v1021 = vunpack.c.l.b16 %v426
    %v1022 = vunpack.c.l.b16 %v427
    %v1023 = vunpack.c.l.b16 %v428
    %v1024 = vunpack.c.l.b16 %v429
    %v1025 = vunpack.c.l.b16 %v430
    %v1026 = vunpack.c.l.b16 %v431
    %v1027 = vunpack.c.l.b16 %v432
    %v1028 = vunpack.c.l.b16 %v433
    %v1029 = vunpack.c.l.b16 %v434
    %v1030 = vunpack.c.l.b16 %v435
    %v1031 = vunpack.c.l.b16 %v436
    %v1032 = vunpack.c.l.b16 %v437
    %v1033 = vunpack.c.l.b16 %v438
    %v1034 = vunpack.c.l.b16 %v439
    %v1035 = vunpack.c.l.b16 %v440
    %v1036 = vunpack.c.l.b16 %v441
    %v1037 = vunpack.c.l.b16 %v442
    %v1038 = vunpack.c.l.b16 %v443
    %v1039 = vunpack.c.l.b16 %v444
    %v1040 = vunpack.c.l.b16 %v445
    %v1041 = vunpack.c.l.b16 %v446
    %v1042 = vunpack.c.l.b16 %v447
    %v1043 = vunpack.c.l.b16 %v448
    %v1044 = vunpack.c.l.b16 %v449
    %v1045 = vunpack.c.l.b16 %v450
    %v1046 = vunpack.c.l.b16 %v451
    %v1047 = vunpack.c.l.b16 %v452
    %v1048 = vunpack.c.l.b16 %v453
    %v1049 = vunpack.c.l.b16 %v454
    %v1050 = vunpack.c.l.b16 %v455
    %v1051 = vunpack.c.l.b16 %v456
    %v1052 = vunpack.c.l.b16 %v457
    %v1053 = vunpack.c.l.b16 %v458
    %v1054 = vunpack.c.l.b16 %v459
    %v1055 = vunpack.c.l.b16 %v460
    %v1056 = vunpack.c.l.b16 %v461
    %v1057 = vunpack.c.l.b16 %v462
    %v1058 = vunpack.c.l.b16 %v463
    %v1059 = vunpack.c.l.b16 %v464
    %v1060 = vunpack.c.l.b16 %v465
    %v1061 = vunpack.c.l.b16 %v466
    %v1062 = vunpack.c.l.b16 %v467
    %v1063 = vunpack.c.l.b16 %v468
    %v1064 = vunpack.c.l.b16 %v469
    %v1065 = vunpack.c.l.b16 %v470
    %v1066 = vunpack.c.l.b16 %v471
    %v1067 = vunpack.c.l.b16 %v472
    %v1068 = vunpack.c.l.b16 %v473
    %v1069 = vunpack.c.l.b16 %v474
    %v1070 = vunpack.c.l.b16 %v475
    %v1071 = vunpack.c.l.b16 %v476
    %v1072 = vunpack.c.l.b16 %v477
    %v1073 = vunpack.c.l.b16 %v478
    %v1074 = vunpack.c.l.b16 %v479
    %v1075 = vunpack.c.l.b16 %v480
    %v1076 = vunpack.c.l.b16 %v481
    %v1077 = vunpack.c.l.b16 %v482
    %v1078 = vunpack.c.l.b16 %v483
    %v1079 = vunpack.c.l.b16 %v484
    %v1080 = vunpack.c.l.b16 %v485
    %v1081 = vunpack.c.l.b16 %v486
    %v1082 = vunpack.c.l.b16 %v487
    %v1083 = vunpack.c.l.b16 %v488
    %v1084 = vunpack.c.l.b16 %v489
    %v1085 = vunpack.c.l.b16 %v490
    %v1086 = vunpack.c.l.b16 %v491
    %v1087 = vunpack.c.l.b16 %v492
    %v1088 = vunpack.c.l.b16 %v493
    %v1089 = vunpack.c.l.b16 %v494
    %v1090 = vunpack.c.l.b16 %v495
    %v1091 = vunpack.c.l.b16 %v496
    %v1092 = vunpack.c.l.b16 %v497
    %v1093 = vunpack.c.l.b16 %v498
    %v1094 = vunpack.c.l.b16 %v499
    %v1095 = vunpack.c.l.b16 %v500
    %v1096 = vunpack.c.l.b16 %v501
    %v1097 = vunpack.c.l.b16 %v502
    %v1098 = vunpack.c.l.b16 %v503
    %v1099 = vunpack.c.l.b16 %v504
    %v1100 = vunpack.c.l.b16 %v505
    %v1101 = vunpack.c.l.b16 %v506
    %v1102 = vpack.c.b16 %v809, %v808
    %v1103 = vpack.c.b16 %v811, %v810
    %v1104 = vpack.c.b16 %v813, %v812
    %v1105 = vpack.c.b16 %v815, %v814
    %v1106 = vpack.c.b16 %v817, %v816
    %v1107 = vpack.c.b16 %v819, %v818
    %v1108 = vpack.c.b16 %v821, %v820
    %v1109 = vpack.c.b16 %v823, %v822
    %v1110 = vpack.c.b16 %v825, %v824
    %v1111 = vpack.c.b16 %v827, %v826
    %v1112 = vpack.c.b16 %v829, %v828
    %v1113 = vpack.c.b16 %v831, %v830
    %v1114 = vpack.c.b16 %v833, %v832
    %v1115 = vpack.c.b16 %v835, %v834
    %v1116 = vpack.c.b16 %v837, %v836
    %v1117 = vpack.c.b16 %v839, %v838
    %v1118 = vpack.c.b16 %v841, %v840
    %v1119 = vpack.c.b16 %v843, %v842
    %v1120 = vpack.c.b16 %v845, %v844
    %v1121 = vpack.c.b16 %v847, %v846
    %v1122 = vpack.c.b16 %v849, %v848
    %v1123 = vpack.c.b16 %v851, %v850
    %v1124 = vpack.c.b16 %v853, %v852
    %v1125 = vpack.c.b16 %v855, %v854
    %v1126 = vpack.c.b16 %v857, %v856
    %v1127 = vpack.c.b16 %v859, %v858
    %v1128 = vpack.c.b16 %v861, %v860
    %v1129 = vpack.c.b16 %v863, %v862
    %v1130 = vpack.c.b16 %v865, %v864
    %v1131 = vpack.c.b16 %v867, %v866
    %v1132 = vpack.c.b16 %v869, %v868
    %v1133 = vpack.c.b16 %v871, %v870
    %v1134 = vpack.c.b16 %v873, %v872
    %v1135 = vpack.c.b16 %v875, %v874
    %v1136 = vpack.c.b16 %v877, %v876
    %v1137 = vpack.c.b16 %v879, %v878
    %v1138 = vpack.c.b16 %v881, %v880
    %v1139 = vpack.c.b16 %v883, %v882
    %v1140 = vpack.c.b16 %v885, %v884
    %v1141 = vpack.c.b16 %v887, %v886
    %v1142 = vpack.c.b16 %v889, %v888
    %v1143 = vpack.c.b16 %v891, %v890
    %v1144 = vpack.c.b16 %v893, %v892
    %v1145 = vpack.c.b16 %v895, %v894
    %v1146 = vpack.c.b16 %v897, %v896
    %v1147 = vpack.c.b16 %v899, %v898
    %v1148 = vpack.c.b16 %v901, %v900
    %v1149 = vpack.c.b16 %v903, %v902
    %v1150 = vpack.c.b16 %v905, %v904
    %v1151 = vpack.c.b16 %v907, %v906
    %v1152 = vpack.c.b16 %v909, %v908
    %v1153 = vpack.c.b16 %v911, %v910
    %v1154 = vpack.c.b16 %v913, %v912
    %v1155 = vpack.c.b16 %v915, %v914
    %v1156 = vpack.c.b16 %v917, %v916
    %v1157 = vpack.c.b16 %v919, %v918
    %v1158 = vpack.c.b16 %v921, %v920
    %v1159 = vpack.c.b16 %v923, %v922
    %v1160 = vpack.c.b16 %v925, %v924
    %v1161 = vpack.c.b16 %v927, %v926
    %v1162 = vpack.c.b16 %v929, %v928
    %v1163 = vpack.c.b16 %v931, %v930
    %v1164 = vpack.c.b16 %v933, %v932
    %v1165 = vpack.c.b16 %v935, %v934
    %v1166 = vpack.c.b16 %v937, %v936
    %v1167 = vpack.c.b16 %v939, %v938
    %v1168 = vpack.c.b16 %v941, %v940
    %v1169 = vpack.c.b16 %v943, %v942
    %v1170 = vpack.c.b16 %v945, %v944
    %v1171 = vpack.c.b16 %v947, %v946
    %v1172 = vpack.c.b16 %v949, %v948
    %v1173 = vpack.c.b16 %v951, %v950
    %v1174 = vpack.c.b16 %v953, %v952
    %v1175 = vpack.c.b16 %v955, %v954
    %v1176 = vpack.c.b16 %v957, %v956
    %v1177 = vpack.c.b16 %v959, %v958
    %v1178 = vpack.c.b16 %v961, %v960
    %v1179 = vpack.c.b16 %v963, %v962
    %v1180 = vpack.c.b16 %v965, %v964
    %v1181 = vpack.c.b16 %v967, %v966
    %v1182 = vpack.c.b16 %v969, %v968
    %v1183 = vpack.c.b16 %v971, %v970
    %v1184 = vpack.c.b16 %v973, %v972
    %v1185 = vpack.c.b16 %v975, %v974
    %v1186 = vpack.c.b16 %v977, %v976
    %v1187 = vpack.c.b16 %v979, %v978
    %v1188 = vpack.c.b16 %v981, %v980
    %v1189 = vpack.c.b16 %v983, %v982
    %v1190 = vpack.c.b16 %v985, %v984
    %v1191 = vpack.c.b16 %v987, %v986
    %v1192 = vpack.c.b16 %v989, %v988
    %v1193 = vpack.c.b16 %v991, %v990
    %v1194 = vpack.c.b16 %v993, %v992
    %v1195 = vpack.c.b16 %v995, %v994
    %v1196 = vpack.c.b16 %v997, %v996
    %v1197 = vpack.c.b16 %v999, %v998
    %v1198 = vpack.c.b16 %v1001, %v1000
    %v1199 = vpack.c.b16 %v1003, %v1002
    %v1200 = vpack.c.b16 %v1005, %v1004
    %v1201 = vpack.c.b16 %v1007, %v1006
    %v1202 = vpack.c.b16 %v1009, %v1008
    %v1203 = vpack.c.b16 %v1011, %v1010
    %v1204 = vpack.c.b16 %v1013, %v1012
    %v1205 = vpack.c.b16 %v1015, %v1014
    %v1206 = vpack.c.b16 %v1017, %v1016
    %v1207 = vpack.c.b16 %v1019, %v1018
    %v1208 = vpack.c.b16 %v1021, %v1020
    %v1209 = vpack.c.b16 %v1023, %v1022
    %v1210 = vpack.c.b16 %v1025, %v1024
    %v1211 = vpack.c.b16 %v1027, %v1026
    %v1212 = vpack.c.b16 %v1029, %v1028
    %v1213 = vpack.c.b16 %v1031, %v1030
    %v1214 = vpack.c.b16 %v1033, %v1032
    %v1215 = vpack.c.b16 %v1035, %v1034
    %v1216 = vpack.c.b16 %v1037, %v1036
    %v1217 = vpack.c.b16 %v1039, %v1038
    %v1218 = vpack.c.b16 %v1041, %v1040
    %v1219 = vpack.c.b16 %v1043, %v1042
    %v1220 = vpack.c.b16 %v1045, %v1044
    %v1221 = vpack.c.b16 %v1047, %v1046
    %v1222 = vpack.c.b16 %v1049, %v1048
    %v1223 = vpack.c.b16 %v1051, %v1050
    %v1224 = vpack.c.b16 %v1053, %v1052
    %v1225 = vpack.c.b16 %v1055, %v1054
    %v1226 = vpack.c.b16 %v1057, %v1056
    %v1227 = vpack.c.b16 %v1059, %v1058
    %v1228 = vpack.c.b16 %v1061, %v1060
    %v1229 = vpack.c.b16 %v1063, %v1062
    %v1230 = vpack.c.b16 %v1065, %v1064
    %v1231 = vpack.c.b16 %v1067, %v1066
    %v1232 = vpack.c.b16 %v1069, %v1068
    %v1233 = vpack.c.b16 %v1071, %v1070
    %v1234 = vpack.c.b16 %v1073, %v1072
    %v1235 = vpack.c.b16 %v1075, %v1074
    %v1236 = vpack.c.b16 %v1077, %v1076
    %v1237 = vpack.c.b16 %v1079, %v1078
    %v1238 = vpack.c.b16 %v1081, %v1080
    %v1239 = vpack.c.b16 %v1083, %v1082
    %v1240 = vpack.c.b16 %v1085, %v1084
    %v1241 = vpack.c.b16 %v1087, %v1086
    %v1242 = vpack.c.b16 %v1089, %v1088
    %v1243 = vpack.c.b16 %v1091, %v1090
    %v1244 = vpack.c.b16 %v1093, %v1092
    %v1245 = vpack.c.b16 %v1095, %v1094
    %v1246 = vpack.c.b16 %v1097, %v1096
    %v1247 = vpack.c.b16 %v1099, %v1098
    %v1248 = vpack.c.b16 %v1101, %v1100
    %vm1396 = vcmask 392192
    %v1398 = vsel %vm1396, %v212, 0
    %1400 = vmatprep.subr.bf16.mxu0 0
    %1401 = vmatpush1.bf16.msra.mxu0 %v1102
    %1402 = vmatprep.subr.bf16.mxu0 0
    %1403 = vmatpush1.bf16.msra.mxu0 %v1103
    %1404 = vmatprep.subr.bf16.mxu0 0
    %1405 = vmatpush1.bf16.msra.mxu0 %v1104
    %1406 = vmatprep.subr.bf16.mxu0 0
    %1407 = vmatpush1.bf16.msra.mxu0 %v1105
    %1408 = vmatprep.subr.bf16.mxu0 0
    %1409 = vmatpush1.bf16.msra.mxu0 %v1106
    %1410 = vmatprep.subr.bf16.mxu0 0
    %1411 = vmatpush1.bf16.msra.mxu0 %v1107
    %1412 = vmatprep.subr.bf16.mxu0 0
    %1413 = vmatpush1.bf16.msra.mxu0 %v1108
    %1414 = vmatprep.subr.bf16.mxu0 0
    %1415 = vmatpush1.bf16.msra.mxu0 %v1109
    %1416 = vmatprep.subr.bf16.mxu0 0
    %1417 = vmatpush1.bf16.msra.mxu0 %v1110
    %1418 = vmatprep.subr.bf16.mxu0 0
    %1419 = vmatpush1.bf16.msra.mxu0 %v1111
    %1420 = vmatprep.subr.bf16.mxu0 0
    %1421 = vmatpush1.bf16.msra.mxu0 %v1112
    %1422 = vmatprep.subr.bf16.mxu0 0
    %1423 = vmatpush1.bf16.msra.mxu0 %v1113
    %1424 = vmatprep.subr.bf16.mxu0 0
    %1425 = vmatpush1.bf16.msra.mxu0 %v1114
    %1426 = vmatprep.subr.bf16.mxu0 0
    %1427 = vmatpush1.bf16.msra.mxu0 %v1115
    %1428 = vmatprep.subr.bf16.mxu0 0
    %1429 = vmatpush1.bf16.msra.mxu0 %v1116
    %1430 = vmatprep.subr.bf16.mxu0 0
    %1431 = vmatpush1.bf16.msra.mxu0 %v1117
    %1432 = vmatprep.mubr.bf16.mxu0 %v195
    %1433 = vmatmul.mubr.bf16.gmra.mrb[0].mxu0 %v194
    %v1434 = vpop.f32.mrb[0].mxu0
    %v1435 = vadd.f32 %v512, %v1434
    %v1436 = vpop.f32.mrb[0].mxu0
    %v1437 = vpop.f32.mrb[0].mxu0
    %v1438 = vpop.f32.mrb[0].mxu0
    %1439 = vdwg.mxu0
    %1440 = vmatprep.subr.bf16.mxu0 0
    %1441 = vmatpush1.bf16.msra.mxu0 %v1118
    %1442 = vmatprep.subr.bf16.mxu0 0
    %1443 = vmatpush1.bf16.msra.mxu0 %v1119
    %1444 = vmatprep.subr.bf16.mxu0 0
    %1445 = vmatpush1.bf16.msra.mxu0 %v1120
    %1446 = vmatprep.subr.bf16.mxu0 0
    %1447 = vmatpush1.bf16.msra.mxu0 %v1121
    %1448 = vmatprep.subr.bf16.mxu0 0
    %1449 = vmatpush1.bf16.msra.mxu0 %v1122
    %1450 = vmatprep.subr.bf16.mxu0 0
    %1451 = vmatpush1.bf16.msra.mxu0 %v1123
    %1452 = vmatprep.subr.bf16.mxu0 0
    %1453 = vmatpush1.bf16.msra.mxu0 %v1124
    %1454 = vmatprep.subr.bf16.mxu0 0
    %1455 = vmatpush1.bf16.msra.mxu0 %v1125
    %1456 = vmatprep.subr.bf16.mxu0 0
    %1457 = vmatpush1.bf16.msra.mxu0 %v1126
    %1458 = vmatprep.subr.bf16.mxu0 0
    %1459 = vmatpush1.bf16.msra.mxu0 %v1127
    %1460 = vmatprep.subr.bf16.mxu0 0
    %1461 = vmatpush1.bf16.msra.mxu0 %v1128
    %1462 = vmatprep.subr.bf16.mxu0 0
    %1463 = vmatpush1.bf16.msra.mxu0 %v1129
    %1464 = vmatprep.subr.bf16.mxu0 0
    %1465 = vmatpush1.bf16.msra.mxu0 %v1130
    %1466 = vmatprep.subr.bf16.mxu0 0
    %1467 = vmatpush1.bf16.msra.mxu0 %v1131
    %1468 = vmatprep.subr.bf16.mxu0 0
    %1469 = vmatpush1.bf16.msra.mxu0 %v1132
    %1470 = vmatprep.subr.bf16.mxu0 0
    %1471 = vmatpush1.bf16.msra.mxu0 %v1133
    %1472 = vmatprep.mubr.bf16.mxu0 %v197
    %1473 = vmatmul.mubr.bf16.gmra.mrb[0].mxu0 %v196
    %v1474 = vpop.f32.mrb[0].mxu0
    %v1475 = vadd.f32 %v1435, %v1474
    %v1476 = vpop.f32.mrb[0].mxu0
    %v1477 = vpop.f32.mrb[0].mxu0
    %v1478 = vpop.f32.mrb[0].mxu0
    %1479 = vdwg.mxu0
    %1480 = vmatprep.subr.bf16.mxu0 0
    %1481 = vmatpush1.bf16.msra.mxu0 %v1134
    %1482 = vmatprep.subr.bf16.mxu0 0
    %1483 = vmatpush1.bf16.msra.mxu0 %v1135
    %1484 = vmatprep.subr.bf16.mxu0 0
    %1485 = vmatpush1.bf16.msra.mxu0 %v1136
    %1486 = vmatprep.subr.bf16.mxu0 0
    %1487 = vmatpush1.bf16.msra.mxu0 %v1137
    %1488 = vmatprep.subr.bf16.mxu0 0
    %1489 = vmatpush1.bf16.msra.mxu0 %v1138
    %1490 = vmatprep.subr.bf16.mxu0 0
    %1491 = vmatpush1.bf16.msra.mxu0 %v1139
    %1492 = vmatprep.subr.bf16.mxu0 0
    %1493 = vmatpush1.bf16.msra.mxu0 %v1140
    %1494 = vmatprep.subr.bf16.mxu0 0
    %1495 = vmatpush1.bf16.msra.mxu0 %v1141
    %1496 = vmatprep.subr.bf16.mxu0 0
    %1497 = vmatpush1.bf16.msra.mxu0 %v1142
    %1498 = vmatprep.subr.bf16.mxu0 0
    %1499 = vmatpush1.bf16.msra.mxu0 %v1143
    %1500 = vmatprep.subr.bf16.mxu0 0
    %1501 = vmatpush1.bf16.msra.mxu0 %v1144
    %1502 = vmatprep.subr.bf16.mxu0 0
    %1503 = vmatpush1.bf16.msra.mxu0 %v1145
    %1504 = vmatprep.subr.bf16.mxu0 0
    %1505 = vmatpush1.bf16.msra.mxu0 %v1146
    %1506 = vmatprep.subr.bf16.mxu0 0
    %1507 = vmatpush1.bf16.msra.mxu0 %v1147
    %1508 = vmatprep.subr.bf16.mxu0 0
    %1509 = vmatpush1.bf16.msra.mxu0 %v1148
    %1510 = vmatprep.subr.bf16.mxu0 0
    %1511 = vmatpush1.bf16.msra.mxu0 %v1149
    %1512 = vmatprep.mubr.bf16.mxu0 %v199
    %1513 = vmatmul.mubr.bf16.gmra.mrb[0].mxu0 %v198
    %v1514 = vpop.f32.mrb[0].mxu0
    %v1515 = vadd.f32 %v1475, %v1514
    %v1516 = vpop.f32.mrb[0].mxu0
    %v1517 = vpop.f32.mrb[0].mxu0
    %v1518 = vpop.f32.mrb[0].mxu0
    %1519 = vdwg.mxu0
    %1520 = vmatprep.subr.bf16.mxu0 0
    %1521 = vmatpush1.bf16.msra.mxu0 %v1150
    %1522 = vmatprep.subr.bf16.mxu0 0
    %1523 = vmatpush1.bf16.msra.mxu0 %v1151
    %1524 = vmatprep.subr.bf16.mxu0 0
    %1525 = vmatpush1.bf16.msra.mxu0 %v1152
    %1526 = vmatprep.subr.bf16.mxu0 0
    %1527 = vmatpush1.bf16.msra.mxu0 %v1153
    %1528 = vmatprep.subr.bf16.mxu0 0
    %1529 = vmatpush1.bf16.msra.mxu0 %v1154
    %1530 = vmatprep.subr.bf16.mxu0 0
    %1531 = vmatpush1.bf16.msra.mxu0 %v1155
    %1532 = vmatprep.subr.bf16.mxu0 0
    %1533 = vmatpush1.bf16.msra.mxu0 %v1156
    %1534 = vmatprep.subr.bf16.mxu0 0
    %1535 = vmatpush1.bf16.msra.mxu0 %v1157
    %1536 = vmatprep.subr.bf16.mxu0 0
    %1537 = vmatpush1.bf16.msra.mxu0 %v1158
    %1538 = vmatprep.subr.bf16.mxu0 0
    %1539 = vmatpush1.bf16.msra.mxu0 %v1159
    %1540 = vmatprep.subr.bf16.mxu0 0
    %1541 = vmatpush1.bf16.msra.mxu0 %v1160
    %1542 = vmatprep.subr.bf16.mxu0 0
    %1543 = vmatpush1.bf16.msra.mxu0 %v1161
    %1544 = vmatprep.subr.bf16.mxu0 0
    %1545 = vmatpush1.bf16.msra.mxu0 %v1162
    %1546 = vmatprep.subr.bf16.mxu0 0
    %1547 = vmatpush1.bf16.msra.mxu0 %v1163
    %1548 = vmatprep.subr.bf16.mxu0 0
    %1549 = vmatpush1.bf16.msra.mxu0 %v1164
    %1550 = vmatprep.subr.bf16.mxu0 0
    %1551 = vmatpush1.bf16.msra.mxu0 %v1165
    %1552 = vmatprep.mubr.bf16.mxu0 %v201
    %1553 = vmatmul.mubr.bf16.gmra.mrb[0].mxu0 %v200
    %v1554 = vpop.f32.mrb[0].mxu0
    %v1555 = vadd.f32 %v1515, %v1554
    %v1556 = vpop.f32.mrb[0].mxu0
    %v1557 = vpop.f32.mrb[0].mxu0
    %v1558 = vpop.f32.mrb[0].mxu0
    %1559 = vdwg.mxu0
    %1560 = vmatprep.subr.bf16.mxu0 0
    %1561 = vmatpush1.bf16.msra.mxu0 %v1166
    %1562 = vmatprep.subr.bf16.mxu0 0
    %1563 = vmatpush1.bf16.msra.mxu0 %v1167
    %1564 = vmatprep.subr.bf16.mxu0 0
    %1565 = vmatpush1.bf16.msra.mxu0 %v1168
    %1566 = vmatprep.subr.bf16.mxu0 0
    %1567 = vmatpush1.bf16.msra.mxu0 %v1169
    %1568 = vmatprep.subr.bf16.mxu0 0
    %1569 = vmatpush1.bf16.msra.mxu0 %v1170
    %1570 = vmatprep.subr.bf16.mxu0 0
    %1571 = vmatpush1.bf16.msra.mxu0 %v1171
    %1572 = vmatprep.subr.bf16.mxu0 0
    %1573 = vmatpush1.bf16.msra.mxu0 %v1172
    %1574 = vmatprep.subr.bf16.mxu0 0
    %1575 = vmatpush1.bf16.msra.mxu0 %v1173
    %1576 = vmatprep.subr.bf16.mxu0 0
    %1577 = vmatpush1.bf16.msra.mxu0 %v1174
    %1578 = vmatprep.subr.bf16.mxu0 0
    %1579 = vmatpush1.bf16.msra.mxu0 %v1175
    %1580 = vmatprep.subr.bf16.mxu0 0
    %1581 = vmatpush1.bf16.msra.mxu0 %v1176
    %1582 = vmatprep.subr.bf16.mxu0 0
    %1583 = vmatpush1.bf16.msra.mxu0 %v1177
    %1584 = vmatprep.subr.bf16.mxu0 0
    %1585 = vmatpush1.bf16.msra.mxu0 %v1178
    %1586 = vmatprep.subr.bf16.mxu0 0
    %1587 = vmatpush1.bf16.msra.mxu0 %v1179
    %1588 = vmatprep.subr.bf16.mxu0 0
    %1589 = vmatpush1.bf16.msra.mxu0 %v1180
    %1590 = vmatprep.subr.bf16.mxu0 0
    %1591 = vmatpush1.bf16.msra.mxu0 %v1181
    %1592 = vmatprep.mubr.bf16.mxu0 %v203
    %1593 = vmatmul.mubr.bf16.gmra.mrb[0].mxu0 %v202
    %v1594 = vpop.f32.mrb[0].mxu0
    %v1595 = vadd.f32 %v1555, %v1594
    %v1596 = vpop.f32.mrb[0].mxu0
    %v1597 = vpop.f32.mrb[0].mxu0
    %v1598 = vpop.f32.mrb[0].mxu0
    %1599 = vdwg.mxu0
    %1600 = vmatprep.subr.bf16.mxu0 0
    %1601 = vmatpush1.bf16.msra.mxu0 %v1182
    %1602 = vmatprep.subr.bf16.mxu0 0
    %1603 = vmatpush1.bf16.msra.mxu0 %v1183
    %1604 = vmatprep.subr.bf16.mxu0 0
    %1605 = vmatpush1.bf16.msra.mxu0 %v1184
    %1606 = vmatprep.subr.bf16.mxu0 0
    %1607 = vmatpush1.bf16.msra.mxu0 %v1185
    %1608 = vmatprep.subr.bf16.mxu0 0
    %1609 = vmatpush1.bf16.msra.mxu0 %v1186
    %1610 = vmatprep.subr.bf16.mxu0 0
    %1611 = vmatpush1.bf16.msra.mxu0 %v1187
    %1612 = vmatprep.subr.bf16.mxu0 0
    %1613 = vmatpush1.bf16.msra.mxu0 %v1188
    %1614 = vmatprep.subr.bf16.mxu0 0
    %1615 = vmatpush1.bf16.msra.mxu0 %v1189
    %1616 = vmatprep.subr.bf16.mxu0 0
    %1617 = vmatpush1.bf16.msra.mxu0 %v1190
    %1618 = vmatprep.subr.bf16.mxu0 0
    %1619 = vmatpush1.bf16.msra.mxu0 %v1191
    %1620 = vmatprep.subr.bf16.mxu0 0
    %1621 = vmatpush1.bf16.msra.mxu0 %v1192
    %1622 = vmatprep.subr.bf16.mxu0 0
    %1623 = vmatpush1.bf16.msra.mxu0 %v1193
    %1624 = vmatprep.subr.bf16.mxu0 0
    %1625 = vmatpush1.bf16.msra.mxu0 %v1194
    %1626 = vmatprep.subr.bf16.mxu0 0
    %1627 = vmatpush1.bf16.msra.mxu0 %v1195
    %1628 = vmatprep.subr.bf16.mxu0 0
    %1629 = vmatpush1.bf16.msra.mxu0 %v1196
    %1630 = vmatprep.subr.bf16.mxu0 0
    %1631 = vmatpush1.bf16.msra.mxu0 %v1197
    %1632 = vmatprep.mubr.bf16.mxu0 %v205
    %1633 = vmatmul.mubr.bf16.gmra.mrb[0].mxu0 %v204
    %v1634 = vpop.f32.mrb[0].mxu0
    %v1635 = vadd.f32 %v1595, %v1634
    %v1636 = vpop.f32.mrb[0].mxu0
    %v1637 = vpop.f32.mrb[0].mxu0
    %v1638 = vpop.f32.mrb[0].mxu0
    %1639 = vdwg.mxu0
    %1640 = vmatprep.subr.bf16.mxu0 0
    %1641 = vmatpush1.bf16.msra.mxu0 %v1198
    %1642 = vmatprep.subr.bf16.mxu0 0
    %1643 = vmatpush1.bf16.msra.mxu0 %v1199
    %1644 = vmatprep.subr.bf16.mxu0 0
    %1645 = vmatpush1.bf16.msra.mxu0 %v1200
    %1646 = vmatprep.subr.bf16.mxu0 0
    %1647 = vmatpush1.bf16.msra.mxu0 %v1201
    %1648 = vmatprep.subr.bf16.mxu0 0
    %1649 = vmatpush1.bf16.msra.mxu0 %v1202
    %1650 = vmatprep.subr.bf16.mxu0 0
    %1651 = vmatpush1.bf16.msra.mxu0 %v1203
    %1652 = vmatprep.subr.bf16.mxu0 0
    %1653 = vmatpush1.bf16.msra.mxu0 %v1204
    %1654 = vmatprep.subr.bf16.mxu0 0
    %1655 = vmatpush1.bf16.msra.mxu0 %v1205
    %1656 = vmatprep.subr.bf16.mxu0 0
    %1657 = vmatpush1.bf16.msra.mxu0 %v1206
    %1658 = vmatprep.subr.bf16.mxu0 0
    %1659 = vmatpush1.bf16.msra.mxu0 %v1207
    %1660 = vmatprep.subr.bf16.mxu0 0
    %1661 = vmatpush1.bf16.msra.mxu0 %v1208
    %1662 = vmatprep.subr.bf16.mxu0 0
    %1663 = vmatpush1.bf16.msra.mxu0 %v1209
    %1664 = vmatprep.subr.bf16.mxu0 0
    %1665 = vmatpush1.bf16.msra.mxu0 %v1210
    %1666 = vmatprep.subr.bf16.mxu0 0
    %1667 = vmatpush1.bf16.msra.mxu0 %v1211
    %1668 = vmatprep.subr.bf16.mxu0 0
    %1669 = vmatpush1.bf16.msra.mxu0 %v1212
    %1670 = vmatprep.subr.bf16.mxu0 0
    %1671 = vmatpush1.bf16.msra.mxu0 %v1213
    %1672 = vmatprep.mubr.bf16.mxu0 %v207
    %1673 = vmatmul.mubr.bf16.gmra.mrb[0].mxu0 %v206
    %v1674 = vpop.f32.mrb[0].mxu0
    %v1675 = vadd.f32 %v1635, %v1674
    %v1676 = vpop.f32.mrb[0].mxu0
    %v1677 = vpop.f32.mrb[0].mxu0
    %v1678 = vpop.f32.mrb[0].mxu0
    %1679 = vdwg.mxu0
    %1680 = vmatprep.subr.bf16.mxu0 0
    %1681 = vmatpush1.bf16.msra.mxu0 %v1214
    %1682 = vmatprep.subr.bf16.mxu0 0
    %1683 = vmatpush1.bf16.msra.mxu0 %v1215
    %1684 = vmatprep.subr.bf16.mxu0 0
    %1685 = vmatpush1.bf16.msra.mxu0 %v1216
    %1686 = vmatprep.subr.bf16.mxu0 0
    %1687 = vmatpush1.bf16.msra.mxu0 %v1217
    %1688 = vmatprep.subr.bf16.mxu0 0
    %1689 = vmatpush1.bf16.msra.mxu0 %v1218
    %1690 = vmatprep.subr.bf16.mxu0 0
    %1691 = vmatpush1.bf16.msra.mxu0 %v1219
    %1692 = vmatprep.subr.bf16.mxu0 0
    %1693 = vmatpush1.bf16.msra.mxu0 %v1220
    %1694 = vmatprep.subr.bf16.mxu0 0
    %1695 = vmatpush1.bf16.msra.mxu0 %v1221
    %1696 = vmatprep.subr.bf16.mxu0 0
    %1697 = vmatpush1.bf16.msra.mxu0 %v1222
    %1698 = vmatprep.subr.bf16.mxu0 0
    %1699 = vmatpush1.bf16.msra.mxu0 %v1223
    %1700 = vmatprep.subr.bf16.mxu0 0
    %1701 = vmatpush1.bf16.msra.mxu0 %v1224
    %1702 = vmatprep.subr.bf16.mxu0 0
    %1703 = vmatpush1.bf16.msra.mxu0 %v1225
    %1704 = vmatprep.subr.bf16.mxu0 0
    %1705 = vmatpush1.bf16.msra.mxu0 %v1226
    %1706 = vmatprep.subr.bf16.mxu0 0
    %1707 = vmatpush1.bf16.msra.mxu0 %v1227
    %1708 = vmatprep.subr.bf16.mxu0 0
    %1709 = vmatpush1.bf16.msra.mxu0 %v1228
    %1710 = vmatprep.subr.bf16.mxu0 0
    %1711 = vmatpush1.bf16.msra.mxu0 %v1229
    %1712 = vmatprep.mubr.bf16.mxu0 %v209
    %1713 = vmatmul.mubr.bf16.gmra.mrb[0].mxu0 %v208
    %v1714 = vpop.f32.mrb[0].mxu0
    %v1715 = vadd.f32 %v1675, %v1714
    %v1716 = vpop.f32.mrb[0].mxu0
    %v1717 = vpop.f32.mrb[0].mxu0
    %v1718 = vpop.f32.mrb[0].mxu0
    %1719 = vdwg.mxu0
    %1720 = vmatprep.subr.bf16.mxu0 0
    %1721 = vmatpush1.bf16.msra.mxu0 %v1230
    %1722 = vmatprep.subr.bf16.mxu0 0
    %1723 = vmatpush1.bf16.msra.mxu0 %v1231
    %1724 = vmatprep.subr.bf16.mxu0 0
    %1725 = vmatpush1.bf16.msra.mxu0 %v1232
    %1726 = vmatprep.subr.bf16.mxu0 0
    %1727 = vmatpush1.bf16.msra.mxu0 %v1233
    %1728 = vmatprep.subr.bf16.mxu0 0
    %1729 = vmatpush1.bf16.msra.mxu0 %v1234
    %1730 = vmatprep.subr.bf16.mxu0 0
    %1731 = vmatpush1.bf16.msra.mxu0 %v1235
    %1732 = vmatprep.subr.bf16.mxu0 0
    %1733 = vmatpush1.bf16.msra.mxu0 %v1236
    %1734 = vmatprep.subr.bf16.mxu0 0
    %1735 = vmatpush1.bf16.msra.mxu0 %v1237
    %1736 = vmatprep.subr.bf16.mxu0 0
    %1737 = vmatpush1.bf16.msra.mxu0 %v1238
    %1738 = vmatprep.subr.bf16.mxu0 0
    %1739 = vmatpush1.bf16.msra.mxu0 %v1239
    %1740 = vmatprep.subr.bf16.mxu0 0
    %1741 = vmatpush1.bf16.msra.mxu0 %v1240
    %1742 = vmatprep.subr.bf16.mxu0 0
    %1743 = vmatpush1.bf16.msra.mxu0 %v1241
    %1744 = vmatprep.subr.bf16.mxu0 0
    %1745 = vmatpush1.bf16.msra.mxu0 %v1242
    %1746 = vmatprep.subr.bf16.mxu0 0
    %1747 = vmatpush1.bf16.msra.mxu0 %v1243
    %1748 = vmatprep.subr.bf16.mxu0 0
    %1749 = vmatpush1.bf16.msra.mxu0 %v1244
    %1750 = vmatprep.subr.bf16.mxu0 0
    %1751 = vmatpush1.bf16.msra.mxu0 %v1245
    %1752 = vmatprep.mubr.bf16.mxu0 %v211
    %1753 = vmatmul.mubr.bf16.gmra.mrb[0].mxu0 %v210
    %v1754 = vpop.f32.mrb[0].mxu0
    %v1755 = vadd.f32 %v1715, %v1754
    %v1756 = vpop.f32.mrb[0].mxu0
    %v1757 = vpop.f32.mrb[0].mxu0
    %v1758 = vpop.f32.mrb[0].mxu0
    %1759 = vdwg.mxu0
    %1760 = vmatprep.subr.bf16.mxu0 0
    %1761 = vmatpush1.bf16.msra.mxu0 %v1246
    %1762 = vmatprep.subr.bf16.mxu0 0
    %1763 = vmatpush1.bf16.msra.mxu0 %v1247
    %1764 = vmatprep.subr.bf16.mxu0 0
    %1765 = vmatpush1.bf16.msra.mxu0 %v1248
    %1766 = vmatprep.subr.bf16.mxu0 0
    %1767 = vmatpush1.bf16.msra.mxu0 0
    %1768 = vmatprep.subr.bf16.mxu0 0
    %1769 = vmatpush1.bf16.msra.mxu0 0
    %1770 = vmatprep.subr.bf16.mxu0 0
    %1771 = vmatpush1.bf16.msra.mxu0 0
    %1772 = vmatprep.subr.bf16.mxu0 0
    %1773 = vmatpush1.bf16.msra.mxu0 0
    %1774 = vmatprep.subr.bf16.mxu0 0
    %1775 = vmatpush1.bf16.msra.mxu0 0
    %1776 = vmatprep.subr.bf16.mxu0 0
    %1777 = vmatpush1.bf16.msra.mxu0 0
    %1778 = vmatprep.subr.bf16.mxu0 0
    %1779 = vmatpush1.bf16.msra.mxu0 0
    %1780 = vmatprep.subr.bf16.mxu0 0
    %1781 = vmatpush1.bf16.msra.mxu0 0
    %1782 = vmatprep.subr.bf16.mxu0 0
    %1783 = vmatpush1.bf16.msra.mxu0 0
    %1784 = vmatprep.subr.bf16.mxu0 0
    %1785 = vmatpush1.bf16.msra.mxu0 0
    %1786 = vmatprep.subr.bf16.mxu0 0
    %1787 = vmatpush1.bf16.msra.mxu0 0
    %1788 = vmatprep.subr.bf16.mxu0 0
    %1789 = vmatpush1.bf16.msra.mxu0 0
    %1790 = vmatprep.subr.bf16.mxu0 0
    %1791 = vmatpush1.bf16.msra.mxu0 0
    %1792 = vmatprep.mubr.bf16.mxu0 0
    %1793 = vmatmul.mubr.bf16.gmra.mrb[0].mxu0 %v1398
    %v1794 = vpop.f32.mrb[0].mxu0
    %v1795 = vadd.f32 %v1755, %v1794
    %v1796 = vpop.f32.mrb[0].mxu0
    %v1797 = vpop.f32.mrb[0].mxu0
    %v1798 = vpop.f32.mrb[0].mxu0
    %1799 = vdwg.mxu0
    %v1800 = vmax.f32 %v1795, 0.0
    %v1801 = vpack.c.bf16 %v1800, %v1800
    %v1802 = vld [vmem:[#allocation7] sm:$0xf]
    %v1803 = vld [vmem:[#allocation7 + $0x4] sm:$0xf]
    %v1804 = vld [vmem:[#allocation7 + $0x8] sm:$0xf]
    %v1805 = vld [vmem:[#allocation7 + $0xc] sm:$0xf]
    %v1806 = vld [vmem:[#allocation7 + $0x10] sm:$0xf]
    %v1807 = vld [vmem:[#allocation7 + $0x14] sm:$0xf]
    %v1808 = vld [vmem:[#allocation7 + $0x18] sm:$0xf]
    %v1809 = vld [vmem:[#allocation7 + $0x1c] sm:$0xf]
    %v1810 = vld [vmem:[#allocation7 + $0x20] sm:$0xf]
    %v1811 = vld [vmem:[#allocation7 + $0x24] sm:$0xf]
    %v1812 = vld [vmem:[#allocation7 + $0x28] sm:$0xf]
    %v1813 = vld [vmem:[#allocation7 + $0x2c] sm:$0xf]
    %v1814 = vld [vmem:[#allocation7 + $0x30] sm:$0xf]
    %v1815 = vld [vmem:[#allocation7 + $0x34] sm:$0xf]
    %v1816 = vld [vmem:[#allocation7 + $0x38] sm:$0xf]
    %v1817 = vld [vmem:[#allocation7 + $0x3c] sm:$0xf]
    %v1818 = vld [vmem:[%s4] sm:$0x1]
    %v1820 = vlaneseq
    %v1821 = vshrl.u32 %v1820, 7
    %v1822 = vsub.s32 0, %v1821
    %v1823 = vrot.slane %v1818, %v1822
    %v1841 = vunpack.c.l.b16 %v1802
    %v1842 = vunpack.c.l.b16 %v1803
    %v1843 = vunpack.c.l.b16 %v1804
    %v1844 = vunpack.c.l.b16 %v1805
    %v1845 = vunpack.c.l.b16 %v1806
    %v1846 = vunpack.c.l.b16 %v1807
    %v1847 = vunpack.c.l.b16 %v1808
    %v1848 = vunpack.c.l.b16 %v1809
    %v1849 = vunpack.c.l.b16 %v1810
    %v1850 = vunpack.c.l.b16 %v1811
    %v1851 = vunpack.c.l.b16 %v1812
    %v1852 = vunpack.c.l.b16 %v1813
    %v1853 = vunpack.c.l.b16 %v1814
    %v1854 = vunpack.c.l.b16 %v1815
    %v1855 = vunpack.c.l.b16 %v1816
    %v1856 = vunpack.c.l.b16 %v1817
    %v1857 = vpack.c.b16 %v1842, %v1841
    %v1858 = vpack.c.b16 %v1844, %v1843
    %v1859 = vpack.c.b16 %v1846, %v1845
    %v1860 = vpack.c.b16 %v1848, %v1847
    %v1861 = vpack.c.b16 %v1850, %v1849
    %v1862 = vpack.c.b16 %v1852, %v1851
    %v1863 = vpack.c.b16 %v1854, %v1853
    %v1864 = vpack.c.b16 %v1856, %v1855
    %1873 = vmatprep.subr.bf16.mxu0 0
    %1874 = vmatpush1.bf16.msra.mxu0 %v1857
    %1875 = vmatprep.subr.bf16.mxu0 0
    %1876 = vmatpush1.bf16.msra.mxu0 %v1858
    %1877 = vmatprep.subr.bf16.mxu0 0
    %1878 = vmatpush1.bf16.msra.mxu0 %v1859
    %1879 = vmatprep.subr.bf16.mxu0 0
    %1880 = vmatpush1.bf16.msra.mxu0 %v1860
    %1881 = vmatprep.subr.bf16.mxu0 0
    %1882 = vmatpush1.bf16.msra.mxu0 %v1861
    %1883 = vmatprep.subr.bf16.mxu0 0
    %1884 = vmatpush1.bf16.msra.mxu0 %v1862
    %1885 = vmatprep.subr.bf16.mxu0 0
    %1886 = vmatpush1.bf16.msra.mxu0 %v1863
    %1887 = vmatprep.subr.bf16.mxu0 0
    %1888 = vmatpush1.bf16.msra.mxu0 %v1864
    %1889 = vmatprep.subr.bf16.mxu0 0
    %1890 = vmatpush1.bf16.msra.mxu0 0
    %1891 = vmatprep.subr.bf16.mxu0 0
    %1892 = vmatpush1.bf16.msra.mxu0 0
    %1893 = vmatprep.subr.bf16.mxu0 0
    %1894 = vmatpush1.bf16.msra.mxu0 0
    %1895 = vmatprep.subr.bf16.mxu0 0
    %1896 = vmatpush1.bf16.msra.mxu0 0
    %1897 = vmatprep.subr.bf16.mxu0 0
    %1898 = vmatpush1.bf16.msra.mxu0 0
    %1899 = vmatprep.subr.bf16.mxu0 0
    %1900 = vmatpush1.bf16.msra.mxu0 0
    %1901 = vmatprep.subr.bf16.mxu0 0
    %1902 = vmatpush1.bf16.msra.mxu0 0
    %1903 = vmatprep.subr.bf16.mxu0 0
    %1904 = vmatpush1.bf16.msra.mxu0 0
    %1905 = vmatprep.mubr.bf16.mxu0 0
    %1906 = vmatmul.mubr.bf16.gmra.mrb[0].mxu0 %v1801
    %v1907 = vpop.f32.mrb[0].mxu0
    %v1908 = vadd.f32 %v1823, %v1907
    %v1909 = vpop.f32.mrb[0].mxu0
    %v1910 = vpop.f32.mrb[0].mxu0
    %v1911 = vpop.f32.mrb[0].mxu0
    %1912 = vdwg.mxu0
    %v1913 = vmax.f32 %v1908, 0.0
    %v1914 = vpack.c.bf16 %v1913, %v1913
    %v1915 = vld [vmem:[#allocation8] sm:$0xf]
    %v1916 = vld [vmem:[#allocation8 + $0x4] sm:$0xf]
    %v1917 = vld [vmem:[#allocation8 + $0x8] sm:$0xf]
    %v1918 = vld [vmem:[#allocation8 + $0xc] sm:$0xf]
    %v1919 = vld [vmem:[#allocation8 + $0x10] sm:$0xf]
    %v1920 = vld [vmem:[#allocation8 + $0x14] sm:$0xf]
    %v1921 = vld [vmem:[#allocation8 + $0x18] sm:$0xf]
    %v1922 = vld [vmem:[#allocation8 + $0x1c] sm:$0xf]
    %v1923 = vld [vmem:[#allocation8 + $0x20] sm:$0xf]
    %v1924 = vld [vmem:[#allocation8 + $0x24] sm:$0xf]
    %v1925 = vld [vmem:[#allocation8 + $0x28] sm:$0xf]
    %v1926 = vld [vmem:[#allocation8 + $0x2c] sm:$0xf]
    %v1927 = vld [vmem:[#allocation8 + $0x30] sm:$0xf]
    %v1928 = vld [vmem:[#allocation8 + $0x34] sm:$0xf]
    %v1929 = vld [vmem:[#allocation8 + $0x38] sm:$0xf]
    %v1930 = vld [vmem:[#allocation8 + $0x3c] sm:$0xf]
    %v1931 = vld [vmem:[%s6] sm:$0x1]
    %v1933 = vlaneseq
    %v1934 = vshrl.u32 %v1933, 7
    %v1935 = vsub.s32 0, %v1934
    %v1936 = vrot.slane %v1931, %v1935
    %v1954 = vunpack.c.l.b16 %v1915
    %v1955 = vunpack.c.l.b16 %v1916
    %v1956 = vunpack.c.l.b16 %v1917
    %v1957 = vunpack.c.l.b16 %v1918
    %v1958 = vunpack.c.l.b16 %v1919
    %v1959 = vunpack.c.l.b16 %v1920
    %v1960 = vunpack.c.l.b16 %v1921
    %v1961 = vunpack.c.l.b16 %v1922
    %v1962 = vunpack.c.l.b16 %v1923
    %v1963 = vunpack.c.l.b16 %v1924
    %v1964 = vunpack.c.l.b16 %v1925
    %v1965 = vunpack.c.l.b16 %v1926
    %v1966 = vunpack.c.l.b16 %v1927
    %v1967 = vunpack.c.l.b16 %v1928
    %v1968 = vunpack.c.l.b16 %v1929
    %v1969 = vunpack.c.l.b16 %v1930
    %v1970 = vpack.c.b16 %v1955, %v1954
    %v1971 = vpack.c.b16 %v1957, %v1956
    %v1972 = vpack.c.b16 %v1959, %v1958
    %v1973 = vpack.c.b16 %v1961, %v1960
    %v1974 = vpack.c.b16 %v1963, %v1962
    %v1975 = vpack.c.b16 %v1965, %v1964
    %v1976 = vpack.c.b16 %v1967, %v1966
    %v1977 = vpack.c.b16 %v1969, %v1968
    %1986 = vmatprep.subr.bf16.mxu0 0
    %1987 = vmatpush1.bf16.msra.mxu0 %v1970
    %1988 = vmatprep.subr.bf16.mxu0 0
    %1989 = vmatpush1.bf16.msra.mxu0 %v1971
    %1990 = vmatprep.subr.bf16.mxu0 0
    %1991 = vmatpush1.bf16.msra.mxu0 %v1972
    %1992 = vmatprep.subr.bf16.mxu0 0
    %1993 = vmatpush1.bf16.msra.mxu0 %v1973
    %1994 = vmatprep.subr.bf16.mxu0 0
    %1995 = vmatpush1.bf16.msra.mxu0 %v1974
    %1996 = vmatprep.subr.bf16.mxu0 0
    %1997 = vmatpush1.bf16.msra.mxu0 %v1975
    %1998 = vmatprep.subr.bf16.mxu0 0
    %1999 = vmatpush1.bf16.msra.mxu0 %v1976
    %2000 = vmatprep.subr.bf16.mxu0 0
    %2001 = vmatpush1.bf16.msra.mxu0 %v1977
    %2002 = vmatprep.subr.bf16.mxu0 0
    %2003 = vmatpush1.bf16.msra.mxu0 0
    %2004 = vmatprep.subr.bf16.mxu0 0
    %2005 = vmatpush1.bf16.msra.mxu0 0
    %2006 = vmatprep.subr.bf16.mxu0 0
    %2007 = vmatpush1.bf16.msra.mxu0 0
    %2008 = vmatprep.subr.bf16.mxu0 0
    %2009 = vmatpush1.bf16.msra.mxu0 0
    %2010 = vmatprep.subr.bf16.mxu0 0
    %2011 = vmatpush1.bf16.msra.mxu0 0
    %2012 = vmatprep.subr.bf16.mxu0 0
    %2013 = vmatpush1.bf16.msra.mxu0 0
    %2014 = vmatprep.subr.bf16.mxu0 0
    %2015 = vmatpush1.bf16.msra.mxu0 0
    %2016 = vmatprep.subr.bf16.mxu0 0
    %2017 = vmatpush1.bf16.msra.mxu0 0
    %2018 = vmatprep.mubr.bf16.mxu0 0
    %2019 = vmatmul.mubr.bf16.gmra.mrb[0].mxu0 %v1914
    %v2020 = vpop.f32.mrb[0].mxu0
    %v2021 = vadd.f32 %v1936, %v2020
    %v2022 = vpop.f32.mrb[0].mxu0
    %v2023 = vpop.f32.mrb[0].mxu0
    %v2024 = vpop.f32.mrb[0].mxu0
    %2025 = vdwg.mxu0
    %v2026 = vmax.f32 %v2021, 0.0
    %v2027 = vpack.c.bf16 %v2026, %v2026
    %2028 = vst [vmem:[#allocation10] sm:$0x1] %v2027
    // Predicated region
    $region46: #{tpu_custom_call.1} parent=1 // pred_check
      _
    $region47: #{tpu_custom_call.1} parent=1 // pred_check_branch
      %2030 = sbr.rel (0) target = $region49
    $region48: #{tpu_custom_call.1} parent=1 // pred_region
      %s2032 = ssub.s32 16, 16
      %2033 = vsyncadd [#allocation4], %s2032
      %s2035 = sshll.u32 [#allocation10], 4
      %s2036 = int_to_ptr.vmem [resolvable:$true] %s2035
      %2038 = dma.vmem_to_hbm [thread:$0]  %s2036, 16, %s7, [#allocation4]
    $region49: #{tpu_custom_call.1} parent=1 // pred_fallthru
      _
    // Predicated region
    $region50: #{tpu_custom_call.1} parent=1 // pred_check
      _
    $region51: #{tpu_custom_call.1} parent=1 // pred_check_branch
      %2040 = sbr.rel (0) target = $region53
    $region52: #{tpu_custom_call.1} parent=1 // pred_region
      %2041 = dma.done [#allocation4], 16
    $region53: #{tpu_custom_call.1} parent=1 // pred_fallthru
      _
    %2042 = vsyncpa [#allocation3], 1
    %2043 = vsyncpa [#allocation6], 1
    %2044 = vsyncpa [#allocation9], 1
    %2045 = vsyncpa [#allocation4], 1

</llo_original>
